<compile_context>
chip_gen: v7x
topology: tpu7x:2x2x1
jax: 0.10.0
libtpu: 0.0.40
codegen_flags: <defaults>
</compile_context>

<pallas_src>
import jax
import jax.numpy as jnp
from jax import lax
from jax.experimental import pallas as pl
from jax.experimental.pallas import tpu as pltpu


# ----------------------------------------------------------------------------
# Fused kernel: PAM attention (query-row tiled) + 3x3 conv (pad=1) + PReLU.
#   x block    : (1, C, HW)  f32 (NCHW flattened), constant across the qi axis
#   wqkv       : (C, 2*C8+C) bf16   = [Wq | Wk | Wv]^T
#   bqkv       : (1, 2*C8+C) f32
#   wconv      : (C, 9*C)    bf16   (Cout, kh*3*C + kw*C + ci) layout
#   bconv      : (C, 1)      f32
#   gamma,alpha: (1,)        f32 scalars in SMEM
#   output     : (1, C, HW)  f32 (NCHW flattened), written at the last qi
# ----------------------------------------------------------------------------
def _make_fused_pam_conv_kernel(H, W, C, C8, TQ):
    HW = H * W
    P = 2 * C8 + C                    # rows of the stacked Q|K|V projection

    def kernel(x_ref, wqkv_ref, bqkv_ref, wconv_ref, bconv_ref,
               gamma_ref, alpha_ref, o_ref,
               q_s, k_s, v_s, attn_s, pad_s, col_s):
        qi = pl.program_id(1)
        nq = pl.num_programs(1)

        # ---- once per batch element: fused bf16 QKV projection ---------------
        @pl.when(qi == 0)
        def _init():
            x = x_ref[0]                                    # (C, HW) f32
            x_t = x.T                                       # (HW, C), in-VMEM XLU transpose
            attn_s[...] = x_t                               # residual term of PAM output
            qkv = jnp.dot(x_t.astype(jnp.bfloat16), wqkv_ref[...],
                          preferred_element_type=jnp.float32)
            qkv = qkv + bqkv_ref[...]                       # (HW, P) f32
            q_s[...] = qkv[:, 0:C8].astype(jnp.bfloat16)
            k_s[...] = qkv[:, C8:2 * C8].astype(jnp.bfloat16)
            v_s[...] = qkv[:, 2 * C8:P].astype(jnp.bfloat16)

        # ---- per query tile: energy -> softmax -> PV --------------------------
        qs = pl.multiple_of(qi * TQ, TQ)
        q_tile = q_s[pl.ds(qs, TQ), :]                      # (TQ, C8) bf16
        # energy[i, j] = sum_o Q[o, qs+i] * K[o, j]   (NT dot, no transposed copy)
        energy = lax.dot_general(q_tile, k_s[...],
                                 (((1,), (1,)), ((), ())),
                                 preferred_element_type=jnp.float32)   # (TQ, HW)
        energy = energy - jnp.max(energy, axis=-1, keepdims=True)      # stable softmax
        pexp = jnp.exp(energy)
        attn = pexp * pl.reciprocal(jnp.sum(pexp, axis=-1, keepdims=True),
                                    approx=True)
        # out[i, c] = sum_j attn[i, j] * V[c, j]      (NN dot, no transposed copy)
        out_t = lax.dot_general(attn.astype(jnp.bfloat16), v_s[...],
                                (((1,), (0,)), ((), ())),
                                preferred_element_type=jnp.float32)    # (TQ, C)
        attn_s[pl.ds(qs, TQ), :] = (gamma_ref[0] * out_t
                                    + attn_s[pl.ds(qs, TQ), :])

        # ---- once per batch element (last tile): 3x3 conv + PReLU -------------
        @pl.when(qi == nq - 1)
        def _finish():
            # zero-halo padded activation, built fully in VMEM (no wrapper pad)
            pad_s[...] = jnp.zeros_like(pad_s)
            for h in range(H):
                pad_s[h + 1, 1:W + 1, :] = (
                    attn_s[h * W:(h + 1) * W, :].astype(jnp.bfloat16))
            # im2col: col_s[n, (kh*3+kw)*C + ci] = pad[h+kh, w+kw, ci], n = h*W+w
            for kh in range(3):
                for kw in range(3):
                    t = kh * 3 + kw
                    col_s[:, t * C:(t + 1) * C] = (
                        pad_s[kh:kh + H, kw:kw + W, :].reshape(HW, C))
            # single K = 9*C matmul; NT form -> lane-dense (C, HW) output
            y = lax.dot_general(wconv_ref[...], col_s[...],
                                (((1,), (1,)), ((), ())),
                                preferred_element_type=jnp.float32)    # (C, HW)
            y = y + bconv_ref[...]
            y = jnp.where(y > 0, y, alpha_ref[0] * y)                  # PReLU
            o_ref[0] = y.astype(o_ref.dtype)

    return kernel


def pam_cam_layer(x, params, *, tq=512):
    """PAM_CAM_Layer forward (use_pam=True). x: (B, C, H, W) -> (B, C, H, W)."""
    B, C, H, W = x.shape
    HW = H * W
    P = params["wqkv_t"].shape[1]
    C8 = (P - C) // 2

    TQ = HW if HW <= tq else tq
    assert HW % TQ == 0, "H*W must be divisible by the query tile size"
    NQ = HW // TQ

    x_flat = x.reshape(B, C, HW).astype(jnp.float32)
    kernel = _make_fused_pam_conv_kernel(H, W, C, C8, TQ)

    out_flat = pl.pallas_call(
        kernel,
        out_shape=jax.ShapeDtypeStruct((B, C, HW), jnp.float32),
        grid=(B, NQ),
        in_specs=[
            pl.BlockSpec((1, C, HW), lambda b, q: (b, 0, 0)),    # x (NCHW, flat)
            pl.BlockSpec((C, P), lambda b, q: (0, 0)),           # [Wq|Wk|Wv]^T bf16
            pl.BlockSpec((1, P), lambda b, q: (0, 0)),           # stacked biases
            pl.BlockSpec((C, 9 * C), lambda b, q: (0, 0)),       # conv W (Cout, 9*Cin) bf16
            pl.BlockSpec((C, 1), lambda b, q: (0, 0)),           # conv bias (Cout, 1)
            pl.BlockSpec(memory_space=pltpu.MemorySpace.SMEM),   # gamma scalar
            pl.BlockSpec(memory_space=pltpu.MemorySpace.SMEM),   # PReLU alpha scalar
        ],
        out_specs=pl.BlockSpec((1, C, HW), lambda b, q: (b, 0, 0)),
        scratch_shapes=[
            pltpu.VMEM((HW, C8), jnp.bfloat16),             # Q  (positions, C/8)
            pltpu.VMEM((HW, C8), jnp.bfloat16),             # K
            pltpu.VMEM((HW, C), jnp.bfloat16),              # V
            pltpu.VMEM((HW, C), jnp.float32),               # PAM output (init = x^T)
            pltpu.VMEM((H + 2, W + 2, C), jnp.bfloat16),    # zero-halo conv input
            pltpu.VMEM((HW, 9 * C), jnp.bfloat16),          # im2col buffer
        ],
        compiler_params=pltpu.CompilerParams(
            dimension_semantics=("parallel", "arbitrary")),
    )(
        x_flat,
        params["wqkv_t"], params["bqkv"],
        params["w_conv9"], params["b_conv_col"],
        params["gamma"], params["alpha"],
    )
    return out_flat.reshape(B, C, H, W)


# ----------------------------------------------------------------------------
# Parameter packing: PyTorch-layout params -> matmul-friendly kernel layouts.
# ----------------------------------------------------------------------------
def prepare_params(raw):
    C = raw["wv"].shape[0]
    wqkv = jnp.concatenate([raw["wq"], raw["wk"], raw["wv"]], axis=0)   # (P, C)
    bqkv = jnp.concatenate([raw["bq"], raw["bk"], raw["bv"]], axis=0)   # (P, 1)
    # OIHW -> (Cout, kh, kw, Cin) -> (Cout, 9*Cin), matching the im2col columns
    w9 = jnp.transpose(raw["w_conv"], (0, 2, 3, 1)).reshape(C, 9 * C)
    return dict(
        wqkv_t=wqkv.T.astype(jnp.bfloat16),              # (C, P)
        bqkv=bqkv.reshape(1, -1).astype(jnp.float32),    # (1, P)
        w_conv9=w9.astype(jnp.bfloat16),                 # (Cout, 9*Cin)
        b_conv_col=raw["b_conv"].reshape(-1, 1).astype(jnp.float32),
        gamma=raw["gamma"].reshape(1).astype(jnp.float32),
        alpha=raw["alpha"].reshape(1).astype(jnp.float32),
    )


# ----------------------------------------------------------------------------
# Pure-JAX f32 reference (mirrors the PyTorch forward) for verification.
# ----------------------------------------------------------------------------
def reference(x, raw):
    B, C, H, W = x.shape
    HW = H * W
    xf = x.reshape(B, C, HW)
    q = jnp.einsum("oc,bcn->bon", raw["wq"], xf) + raw["bq"][None]
    k = jnp.einsum("oc,bcn->bon", raw["wk"], xf) + raw["bk"][None]
    v = jnp.einsum("oc,bcn->bon", raw["wv"], xf) + raw["bv"][None]
    energy = jnp.einsum("bon,bom->bnm", q, k)            # (B, HW, HW)
    attn = jax.nn.softmax(energy, axis=-1)
    out = jnp.einsum("bcj,bij->bci", v, attn)            # V @ attn^T
    out = raw["gamma"][0] * out + xf
    out = out.reshape(B, C, H, W)
    y = lax.conv_general_dilated(out, raw["w_conv"], (1, 1), "SAME",
                                 dimension_numbers=("NCHW", "OIHW", "NCHW"))
    y = y + raw["b_conv"].reshape(1, -1, 1, 1)
    return jnp.where(y > 0, y, raw["alpha"][0] * y)


def init_raw_params(key, in_ch):
    c8 = max(in_ch // 8, 1)
    ks = jax.random.split(key, 8)
    s = 0.1
    return dict(
        wq=s * jax.random.normal(ks[0], (c8, in_ch), jnp.float32),
        bq=s * jax.random.normal(ks[1], (c8, 1), jnp.float32),
        wk=s * jax.random.normal(ks[2], (c8, in_ch), jnp.float32),
        bk=s * jax.random.normal(ks[3], (c8, 1), jnp.float32),
        wv=s * jax.random.normal(ks[4], (in_ch, in_ch), jnp.float32),
        bv=s * jax.random.normal(ks[5], (in_ch, 1), jnp.float32),
        # PyTorch inits gamma to 0; use a nonzero value so the attention path
        # is actually exercised by the numeric check.
        gamma=jnp.array([0.7], jnp.float32),
        w_conv=s * jax.random.normal(ks[6], (in_ch, in_ch, 3, 3), jnp.float32),
        b_conv=s * jax.random.normal(ks[7], (in_ch,), jnp.float32),
        alpha=jnp.array([0.25], jnp.float32),             # PReLU default init
    )


if __name__ == "__main__":
    B, C, H, W = 2, 16, 8, 8
    key = jax.random.PRNGKey(0)
    kx, kp = jax.random.split(key)
    x = jax.random.normal(kx, (B, C, H, W), jnp.float32)

    raw = init_raw_params(kp, C)
    params = prepare_params(raw)

    out = pam_cam_layer(x, params)
    out = jax.block_until_ready(out)

    ref = reference(x, raw)
    assert out.shape == (B, C, H, W)
    rel_err = float(jnp.max(jnp.abs(out - ref)) / (jnp.max(jnp.abs(ref)) + 1e-6))
    # bf16 MXU operands with f32 accumulation -> allow small drift vs f32 ref.
    assert rel_err < 6e-2, f"relative error too large: {rel_err}"
    print("KERNEL_OK")
</pallas_src>

<mosaic_0001>
module attributes {stable_mosaic.version = 11 : i64} {
  func.func @kernel(%arg0: i32, %arg1: i32, %arg2: memref<1x16x64xf32, #tpu.memory_space<vmem>>, %arg3: memref<16x20xbf16, #tpu.memory_space<vmem>>, %arg4: memref<1x20xf32, #tpu.memory_space<vmem>>, %arg5: memref<16x144xbf16, #tpu.memory_space<vmem>>, %arg6: memref<16x1xf32, #tpu.memory_space<vmem>>, %arg7: memref<1xf32, #tpu.memory_space<smem>>, %arg8: memref<1xf32, #tpu.memory_space<smem>>, %arg9: memref<1x16x64xf32, #tpu.memory_space<vmem>>, %arg10: memref<64x2xbf16, #tpu.memory_space<vmem>>, %arg11: memref<64x2xbf16, #tpu.memory_space<vmem>>, %arg12: memref<64x16xbf16, #tpu.memory_space<vmem>>, %arg13: memref<64x16xf32, #tpu.memory_space<vmem>>, %arg14: memref<10x10x16xbf16, #tpu.memory_space<vmem>>, %arg15: memref<64x144xbf16, #tpu.memory_space<vmem>>) attributes {dimension_semantics = [#tpu.dimension_semantics<parallel>, #tpu.dimension_semantics<arbitrary>], iteration_bounds = array<i64: 2, 1>, scalar_prefetch = 0 : i64, scratch_operands = 6 : i64, tpu.core_type = #tpu.core_type<tc>, window_params = [{transform_indices = @transform_0, window_bounds = array<i64: 1, 16, 64>}, {pipeline_mode = #tpu.pipeline_mode<synchronous>, transform_indices = @transform_1, window_bounds = array<i64: 16, 20>}, {pipeline_mode = #tpu.pipeline_mode<synchronous>, transform_indices = @transform_2, window_bounds = array<i64: 1, 20>}, {pipeline_mode = #tpu.pipeline_mode<synchronous>, transform_indices = @transform_3, window_bounds = array<i64: 16, 144>}, {pipeline_mode = #tpu.pipeline_mode<synchronous>, transform_indices = @transform_4, window_bounds = array<i64: 16, 1>}, {transform_indices = @transform_5, window_bounds = array<i64: 1>}, {transform_indices = @transform_6, window_bounds = array<i64: 1>}, {transform_indices = @transform_7, window_bounds = array<i64: 1, 16, 64>}]} {
    %c0_i32 = arith.constant 0 : i32
    %0 = arith.cmpi eq, %arg1, %c0_i32 : i32
    %1 = arith.extui %0 : i1 to i32
    %c0_i32_0 = arith.constant 0 : i32
    %2 = arith.cmpi ne, %1, %c0_i32_0 : i32
    scf.if %2 {
      %c0_13 = arith.constant 0 : index
      %c0_14 = arith.constant 0 : index
      %c0_15 = arith.constant 0 : index
      %33 = vector.load %arg2[%c0_13, %c0_14, %c0_15] : memref<1x16x64xf32, #tpu.memory_space<vmem>>, vector<1x16x64xf32>
      %34 = vector.shape_cast %33 : vector<1x16x64xf32> to vector<16x64xf32>
      %35 = tpu.transpose %34, [1, 0] : vector<16x64xf32> -> vector<64x16xf32>
      %c0_16 = arith.constant 0 : index
      %c0_17 = arith.constant 0 : index
      %36 = vector.load %arg13[%c0_16, %c0_17] : memref<64x16xf32, #tpu.memory_space<vmem>>, vector<64x16xf32>
      tpu.vector_store %arg13[%c0_16, %c0_17], %35 {strides = array<i32>} : memref<64x16xf32, #tpu.memory_space<vmem>>, vector<64x16xf32>,
      %37 = arith.truncf %35 : vector<64x16xf32> to vector<64x16xbf16>
      %c0_18 = arith.constant 0 : index
      %c0_19 = arith.constant 0 : index
      %38 = vector.load %arg3[%c0_18, %c0_19] : memref<16x20xbf16, #tpu.memory_space<vmem>>, vector<16x20xbf16>
      %cst_20 = arith.constant dense<0.000000e+00> : vector<64x20xf32>
      %39 = tpu.matmul %37, %38, %cst_20 {dimension_numbers = #tpu.dot_dimension_numbers<[1], [0], [0], [1], [0, 0, 1, 1], [], []>} : vector<64x16xbf16>, vector<16x20xbf16>, vector<64x20xf32> -> vector<64x20xf32>
      %c0_21 = arith.constant 0 : index
      %c0_22 = arith.constant 0 : index
      %40 = vector.load %arg4[%c0_21, %c0_22] : memref<1x20xf32, #tpu.memory_space<vmem>>, vector<1x20xf32>
      %41 = vector.broadcast %40 : vector<1x20xf32> to vector<64x20xf32>
      %42 = arith.addf %39, %41 : vector<64x20xf32>
      %43 = vector.extract_strided_slice %42 {offsets = [0, 0], sizes = [64, 2], strides = [1, 1]} : vector<64x20xf32> to vector<64x2xf32>
      %44 = arith.truncf %43 : vector<64x2xf32> to vector<64x2xbf16>
      %c0_23 = arith.constant 0 : index
      %c0_24 = arith.constant 0 : index
      %45 = vector.load %arg10[%c0_23, %c0_24] : memref<64x2xbf16, #tpu.memory_space<vmem>>, vector<64x2xbf16>
      tpu.vector_store %arg10[%c0_23, %c0_24], %44 {strides = array<i32>} : memref<64x2xbf16, #tpu.memory_space<vmem>>, vector<64x2xbf16>,
      %46 = vector.extract_strided_slice %42 {offsets = [0, 2], sizes = [64, 2], strides = [1, 1]} : vector<64x20xf32> to vector<64x2xf32>
      %47 = arith.truncf %46 : vector<64x2xf32> to vector<64x2xbf16>
      %c0_25 = arith.constant 0 : index
      %c0_26 = arith.constant 0 : index
      %48 = vector.load %arg11[%c0_25, %c0_26] : memref<64x2xbf16, #tpu.memory_space<vmem>>, vector<64x2xbf16>
      tpu.vector_store %arg11[%c0_25, %c0_26], %47 {strides = array<i32>} : memref<64x2xbf16, #tpu.memory_space<vmem>>, vector<64x2xbf16>,
      %49 = vector.extract_strided_slice %42 {offsets = [0, 4], sizes = [64, 16], strides = [1, 1]} : vector<64x20xf32> to vector<64x16xf32>
      %50 = arith.truncf %49 : vector<64x16xf32> to vector<64x16xbf16>
      %c0_27 = arith.constant 0 : index
      %c0_28 = arith.constant 0 : index
      %51 = vector.load %arg12[%c0_27, %c0_28] : memref<64x16xbf16, #tpu.memory_space<vmem>>, vector<64x16xbf16>
      tpu.vector_store %arg12[%c0_27, %c0_28], %50 {strides = array<i32>} : memref<64x16xbf16, #tpu.memory_space<vmem>>, vector<64x16xbf16>,
    } else {
    }
    %c64_i32 = arith.constant 64 : i32
    %3 = arith.muli %arg1, %c64_i32 : i32
    %4 = tpu.assume_multiple %3, 64 : i32
    %5 = arith.index_cast %4 : i32 to index
    %c0 = arith.constant 0 : index
    %6 = vector.load %arg10[%5, %c0] : memref<64x2xbf16, #tpu.memory_space<vmem>>, vector<64x2xbf16>
    %c0_1 = arith.constant 0 : index
    %c0_2 = arith.constant 0 : index
    %7 = vector.load %arg11[%c0_1, %c0_2] : memref<64x2xbf16, #tpu.memory_space<vmem>>, vector<64x2xbf16>
    %cst = arith.constant dense<0.000000e+00> : vector<64x64xf32>
    %8 = tpu.matmul %6, %7, %cst {dimension_numbers = #tpu.dot_dimension_numbers<[1], [1], [0], [0], [0, 0, 1, 0], [], []>} : vector<64x2xbf16>, vector<64x2xbf16>, vector<64x64xf32> -> vector<64x64xf32>
    %cst_3 = arith.constant dense<0xFF800000> : vector<64xf32>
    %9 = vector.multi_reduction <maximumf>, %8, %cst_3 [1] : vector<64x64xf32> to vector<64xf32>
    %10 = vector.shape_cast %9 : vector<64xf32> to vector<64x1xf32>
    %11 = vector.broadcast %10 : vector<64x1xf32> to vector<64x64xf32>
    %12 = arith.subf %8, %11 : vector<64x64xf32>
    %13 = math.exp %12 : vector<64x64xf32>
    %cst_4 = arith.constant dense<0.000000e+00> : vector<64xf32>
    %14 = vector.multi_reduction <add>, %13, %cst_4 [1] : vector<64x64xf32> to vector<64xf32>
    %15 = vector.shape_cast %14 : vector<64xf32> to vector<64x1xf32>
    %16 = tpu.reciprocal %15 {approx = true} : vector<64x1xf32> -> vector<64x1xf32>
    %17 = vector.broadcast %16 : vector<64x1xf32> to vector<64x64xf32>
    %18 = arith.mulf %13, %17 : vector<64x64xf32>
    %19 = arith.truncf %18 : vector<64x64xf32> to vector<64x64xbf16>
    %c0_5 = arith.constant 0 : index
    %c0_6 = arith.constant 0 : index
    %20 = vector.load %arg12[%c0_5, %c0_6] : memref<64x16xbf16, #tpu.memory_space<vmem>>, vector<64x16xbf16>
    %cst_7 = arith.constant dense<0.000000e+00> : vector<64x16xf32>
    %21 = tpu.matmul %19, %20, %cst_7 {dimension_numbers = #tpu.dot_dimension_numbers<[1], [0], [0], [1], [0, 0, 1, 1], [], []>} : vector<64x64xbf16>, vector<64x16xbf16>, vector<64x16xf32> -> vector<64x16xf32>
    %c0_8 = arith.constant 0 : index
    %22 = memref.load %arg7[%c0_8] : memref<1xf32, #tpu.memory_space<smem>>
    %23 = vector.broadcast %22 : f32 to vector<64x16xf32>
    %24 = arith.mulf %23, %21 : vector<64x16xf32>
    %25 = arith.index_cast %4 : i32 to index
    %c0_9 = arith.constant 0 : index
    %26 = vector.load %arg13[%25, %c0_9] : memref<64x16xf32, #tpu.memory_space<vmem>>, vector<64x16xf32>
    %27 = arith.addf %24, %26 : vector<64x16xf32>
    %28 = arith.index_cast %4 : i32 to index
    %c0_10 = arith.constant 0 : index
    %29 = vector.load %arg13[%28, %c0_10] : memref<64x16xf32, #tpu.memory_space<vmem>>, vector<64x16xf32>
    tpu.vector_store %arg13[%28, %c0_10], %27 {strides = array<i32>} : memref<64x16xf32, #tpu.memory_space<vmem>>, vector<64x16xf32>,
    %c0_i32_11 = arith.constant 0 : i32
    %30 = arith.cmpi eq, %arg1, %c0_i32_11 : i32
    %31 = arith.extui %30 : i1 to i32
    %c0_i32_12 = arith.constant 0 : i32
    %32 = arith.cmpi ne, %31, %c0_i32_12 : i32
    scf.if %32 {
      %cst_13 = arith.constant 0.000000e+00 : bf16
      %33 = vector.broadcast %cst_13 : bf16 to vector<10x10x16xbf16>
      %c0_14 = arith.constant 0 : index
      %c0_15 = arith.constant 0 : index
      %c0_16 = arith.constant 0 : index
      %34 = vector.load %arg14[%c0_14, %c0_15, %c0_16] : memref<10x10x16xbf16, #tpu.memory_space<vmem>>, vector<10x10x16xbf16>
      tpu.vector_store %arg14[%c0_14, %c0_15, %c0_16], %33 {strides = array<i32>} : memref<10x10x16xbf16, #tpu.memory_space<vmem>>, vector<10x10x16xbf16>,
      %c0_17 = arith.constant 0 : index
      %c0_18 = arith.constant 0 : index
      %35 = vector.load %arg13[%c0_17, %c0_18] : memref<64x16xf32, #tpu.memory_space<vmem>>, vector<8x16xf32>
      %36 = arith.truncf %35 : vector<8x16xf32> to vector<8x16xbf16>
      %c1 = arith.constant 1 : index
      %c1_19 = arith.constant 1 : index
      %c0_20 = arith.constant 0 : index
      %37 = vector.load %arg14[%c1, %c1_19, %c0_20] : memref<10x10x16xbf16, #tpu.memory_space<vmem>>, vector<1x8x16xbf16>
      %38 = vector.shape_cast %37 : vector<1x8x16xbf16> to vector<8x16xbf16>
      %39 = vector.shape_cast %36 : vector<8x16xbf16> to vector<1x8x16xbf16>
      tpu.vector_store %arg14[%c1, %c1_19, %c0_20], %39 {strides = array<i32>} : memref<10x10x16xbf16, #tpu.memory_space<vmem>>, vector<1x8x16xbf16>,
      %c8 = arith.constant 8 : index
      %c0_21 = arith.constant 0 : index
      %40 = vector.load %arg13[%c8, %c0_21] : memref<64x16xf32, #tpu.memory_space<vmem>>, vector<8x16xf32>
      %41 = arith.truncf %40 : vector<8x16xf32> to vector<8x16xbf16>
      %c2 = arith.constant 2 : index
      %c1_22 = arith.constant 1 : index
      %c0_23 = arith.constant 0 : index
      %42 = vector.load %arg14[%c2, %c1_22, %c0_23] : memref<10x10x16xbf16, #tpu.memory_space<vmem>>, vector<1x8x16xbf16>
      %43 = vector.shape_cast %42 : vector<1x8x16xbf16> to vector<8x16xbf16>
      %44 = vector.shape_cast %41 : vector<8x16xbf16> to vector<1x8x16xbf16>
      tpu.vector_store %arg14[%c2, %c1_22, %c0_23], %44 {strides = array<i32>} : memref<10x10x16xbf16, #tpu.memory_space<vmem>>, vector<1x8x16xbf16>,
      %c16 = arith.constant 16 : index
      %c0_24 = arith.constant 0 : index
      %45 = vector.load %arg13[%c16, %c0_24] : memref<64x16xf32, #tpu.memory_space<vmem>>, vector<8x16xf32>
      %46 = arith.truncf %45 : vector<8x16xf32> to vector<8x16xbf16>
      %c3 = arith.constant 3 : index
      %c1_25 = arith.constant 1 : index
      %c0_26 = arith.constant 0 : index
      %47 = vector.load %arg14[%c3, %c1_25, %c0_26] : memref<10x10x16xbf16, #tpu.memory_space<vmem>>, vector<1x8x16xbf16>
      %48 = vector.shape_cast %47 : vector<1x8x16xbf16> to vector<8x16xbf16>
      %49 = vector.shape_cast %46 : vector<8x16xbf16> to vector<1x8x16xbf16>
      tpu.vector_store %arg14[%c3, %c1_25, %c0_26], %49 {strides = array<i32>} : memref<10x10x16xbf16, #tpu.memory_space<vmem>>, vector<1x8x16xbf16>,
      %c24 = arith.constant 24 : index
      %c0_27 = arith.constant 0 : index
      %50 = vector.load %arg13[%c24, %c0_27] : memref<64x16xf32, #tpu.memory_space<vmem>>, vector<8x16xf32>
      %51 = arith.truncf %50 : vector<8x16xf32> to vector<8x16xbf16>
      %c4 = arith.constant 4 : index
      %c1_28 = arith.constant 1 : index
      %c0_29 = arith.constant 0 : index
      %52 = vector.load %arg14[%c4, %c1_28, %c0_29] : memref<10x10x16xbf16, #tpu.memory_space<vmem>>, vector<1x8x16xbf16>
      %53 = vector.shape_cast %52 : vector<1x8x16xbf16> to vector<8x16xbf16>
      %54 = vector.shape_cast %51 : vector<8x16xbf16> to vector<1x8x16xbf16>
      tpu.vector_store %arg14[%c4, %c1_28, %c0_29], %54 {strides = array<i32>} : memref<10x10x16xbf16, #tpu.memory_space<vmem>>, vector<1x8x16xbf16>,
      %c32 = arith.constant 32 : index
      %c0_30 = arith.constant 0 : index
      %55 = vector.load %arg13[%c32, %c0_30] : memref<64x16xf32, #tpu.memory_space<vmem>>, vector<8x16xf32>
      %56 = arith.truncf %55 : vector<8x16xf32> to vector<8x16xbf16>
      %c5 = arith.constant 5 : index
      %c1_31 = arith.constant 1 : index
      %c0_32 = arith.constant 0 : index
      %57 = vector.load %arg14[%c5, %c1_31, %c0_32] : memref<10x10x16xbf16, #tpu.memory_space<vmem>>, vector<1x8x16xbf16>
      %58 = vector.shape_cast %57 : vector<1x8x16xbf16> to vector<8x16xbf16>
      %59 = vector.shape_cast %56 : vector<8x16xbf16> to vector<1x8x16xbf16>
      tpu.vector_store %arg14[%c5, %c1_31, %c0_32], %59 {strides = array<i32>} : memref<10x10x16xbf16, #tpu.memory_space<vmem>>, vector<1x8x16xbf16>,
      %c40 = arith.constant 40 : index
      %c0_33 = arith.constant 0 : index
      %60 = vector.load %arg13[%c40, %c0_33] : memref<64x16xf32, #tpu.memory_space<vmem>>, vector<8x16xf32>
      %61 = arith.truncf %60 : vector<8x16xf32> to vector<8x16xbf16>
      %c6 = arith.constant 6 : index
      %c1_34 = arith.constant 1 : index
      %c0_35 = arith.constant 0 : index
      %62 = vector.load %arg14[%c6, %c1_34, %c0_35] : memref<10x10x16xbf16, #tpu.memory_space<vmem>>, vector<1x8x16xbf16>
      %63 = vector.shape_cast %62 : vector<1x8x16xbf16> to vector<8x16xbf16>
      %64 = vector.shape_cast %61 : vector<8x16xbf16> to vector<1x8x16xbf16>
      tpu.vector_store %arg14[%c6, %c1_34, %c0_35], %64 {strides = array<i32>} : memref<10x10x16xbf16, #tpu.memory_space<vmem>>, vector<1x8x16xbf16>,
      %c48 = arith.constant 48 : index
      %c0_36 = arith.constant 0 : index
      %65 = vector.load %arg13[%c48, %c0_36] : memref<64x16xf32, #tpu.memory_space<vmem>>, vector<8x16xf32>
      %66 = arith.truncf %65 : vector<8x16xf32> to vector<8x16xbf16>
      %c7 = arith.constant 7 : index
      %c1_37 = arith.constant 1 : index
      %c0_38 = arith.constant 0 : index
      %67 = vector.load %arg14[%c7, %c1_37, %c0_38] : memref<10x10x16xbf16, #tpu.memory_space<vmem>>, vector<1x8x16xbf16>
      %68 = vector.shape_cast %67 : vector<1x8x16xbf16> to vector<8x16xbf16>
      %69 = vector.shape_cast %66 : vector<8x16xbf16> to vector<1x8x16xbf16>
      tpu.vector_store %arg14[%c7, %c1_37, %c0_38], %69 {strides = array<i32>} : memref<10x10x16xbf16, #tpu.memory_space<vmem>>, vector<1x8x16xbf16>,
      %c56 = arith.constant 56 : index
      %c0_39 = arith.constant 0 : index
      %70 = vector.load %arg13[%c56, %c0_39] : memref<64x16xf32, #tpu.memory_space<vmem>>, vector<8x16xf32>
      %71 = arith.truncf %70 : vector<8x16xf32> to vector<8x16xbf16>
      %c8_40 = arith.constant 8 : index
      %c1_41 = arith.constant 1 : index
      %c0_42 = arith.constant 0 : index
      %72 = vector.load %arg14[%c8_40, %c1_41, %c0_42] : memref<10x10x16xbf16, #tpu.memory_space<vmem>>, vector<1x8x16xbf16>
      %73 = vector.shape_cast %72 : vector<1x8x16xbf16> to vector<8x16xbf16>
      %74 = vector.shape_cast %71 : vector<8x16xbf16> to vector<1x8x16xbf16>
      tpu.vector_store %arg14[%c8_40, %c1_41, %c0_42], %74 {strides = array<i32>} : memref<10x10x16xbf16, #tpu.memory_space<vmem>>, vector<1x8x16xbf16>,
      %c0_43 = arith.constant 0 : index
      %c0_44 = arith.constant 0 : index
      %c0_45 = arith.constant 0 : index
      %75 = vector.load %arg14[%c0_43, %c0_44, %c0_45] : memref<10x10x16xbf16, #tpu.memory_space<vmem>>, vector<8x8x16xbf16>
      %76 = vector.shape_cast %75 : vector<8x8x16xbf16> to vector<64x16xbf16>
      %c0_46 = arith.constant 0 : index
      %c0_47 = arith.constant 0 : index
      %77 = vector.load %arg15[%c0_46, %c0_47] : memref<64x144xbf16, #tpu.memory_space<vmem>>, vector<64x16xbf16>
      tpu.vector_store %arg15[%c0_46, %c0_47], %76 {strides = array<i32>} : memref<64x144xbf16, #tpu.memory_space<vmem>>, vector<64x16xbf16>,
      %c0_48 = arith.constant 0 : index
      %c1_49 = arith.constant 1 : index
      %c0_50 = arith.constant 0 : index
      %78 = vector.load %arg14[%c0_48, %c1_49, %c0_50] : memref<10x10x16xbf16, #tpu.memory_space<vmem>>, vector<8x8x16xbf16>
      %79 = vector.shape_cast %78 : vector<8x8x16xbf16> to vector<64x16xbf16>
      %c0_51 = arith.constant 0 : index
      %c16_52 = arith.constant 16 : index
      %80 = vector.load %arg15[%c0_51, %c16_52] : memref<64x144xbf16, #tpu.memory_space<vmem>>, vector<64x16xbf16>
      tpu.vector_store %arg15[%c0_51, %c16_52], %79 {strides = array<i32>} : memref<64x144xbf16, #tpu.memory_space<vmem>>, vector<64x16xbf16>,
      %c0_53 = arith.constant 0 : index
      %c2_54 = arith.constant 2 : index
      %c0_55 = arith.constant 0 : index
      %81 = vector.load %arg14[%c0_53, %c2_54, %c0_55] : memref<10x10x16xbf16, #tpu.memory_space<vmem>>, vector<8x8x16xbf16>
      %82 = vector.shape_cast %81 : vector<8x8x16xbf16> to vector<64x16xbf16>
      %c0_56 = arith.constant 0 : index
      %c32_57 = arith.constant 32 : index
      %83 = vector.load %arg15[%c0_56, %c32_57] : memref<64x144xbf16, #tpu.memory_space<vmem>>, vector<64x16xbf16>
      tpu.vector_store %arg15[%c0_56, %c32_57], %82 {strides = array<i32>} : memref<64x144xbf16, #tpu.memory_space<vmem>>, vector<64x16xbf16>,
      %c1_58 = arith.constant 1 : index
      %c0_59 = arith.constant 0 : index
      %c0_60 = arith.constant 0 : index
      %84 = vector.load %arg14[%c1_58, %c0_59, %c0_60] : memref<10x10x16xbf16, #tpu.memory_space<vmem>>, vector<8x8x16xbf16>
      %85 = vector.shape_cast %84 : vector<8x8x16xbf16> to vector<64x16xbf16>
      %c0_61 = arith.constant 0 : index
      %c48_62 = arith.constant 48 : index
      %86 = vector.load %arg15[%c0_61, %c48_62] : memref<64x144xbf16, #tpu.memory_space<vmem>>, vector<64x16xbf16>
      tpu.vector_store %arg15[%c0_61, %c48_62], %85 {strides = array<i32>} : memref<64x144xbf16, #tpu.memory_space<vmem>>, vector<64x16xbf16>,
      %c1_63 = arith.constant 1 : index
      %c1_64 = arith.constant 1 : index
      %c0_65 = arith.constant 0 : index
      %87 = vector.load %arg14[%c1_63, %c1_64, %c0_65] : memref<10x10x16xbf16, #tpu.memory_space<vmem>>, vector<8x8x16xbf16>
      %88 = vector.shape_cast %87 : vector<8x8x16xbf16> to vector<64x16xbf16>
      %c0_66 = arith.constant 0 : index
      %c64 = arith.constant 64 : index
      %89 = vector.load %arg15[%c0_66, %c64] : memref<64x144xbf16, #tpu.memory_space<vmem>>, vector<64x16xbf16>
      tpu.vector_store %arg15[%c0_66, %c64], %88 {strides = array<i32>} : memref<64x144xbf16, #tpu.memory_space<vmem>>, vector<64x16xbf16>,
      %c1_67 = arith.constant 1 : index
      %c2_68 = arith.constant 2 : index
      %c0_69 = arith.constant 0 : index
      %90 = vector.load %arg14[%c1_67, %c2_68, %c0_69] : memref<10x10x16xbf16, #tpu.memory_space<vmem>>, vector<8x8x16xbf16>
      %91 = vector.shape_cast %90 : vector<8x8x16xbf16> to vector<64x16xbf16>
      %c0_70 = arith.constant 0 : index
      %c80 = arith.constant 80 : index
      %92 = vector.load %arg15[%c0_70, %c80] : memref<64x144xbf16, #tpu.memory_space<vmem>>, vector<64x16xbf16>
      tpu.vector_store %arg15[%c0_70, %c80], %91 {strides = array<i32>} : memref<64x144xbf16, #tpu.memory_space<vmem>>, vector<64x16xbf16>,
      %c2_71 = arith.constant 2 : index
      %c0_72 = arith.constant 0 : index
      %c0_73 = arith.constant 0 : index
      %93 = vector.load %arg14[%c2_71, %c0_72, %c0_73] : memref<10x10x16xbf16, #tpu.memory_space<vmem>>, vector<8x8x16xbf16>
      %94 = vector.shape_cast %93 : vector<8x8x16xbf16> to vector<64x16xbf16>
      %c0_74 = arith.constant 0 : index
      %c96 = arith.constant 96 : index
      %95 = vector.load %arg15[%c0_74, %c96] : memref<64x144xbf16, #tpu.memory_space<vmem>>, vector<64x16xbf16>
      tpu.vector_store %arg15[%c0_74, %c96], %94 {strides = array<i32>} : memref<64x144xbf16, #tpu.memory_space<vmem>>, vector<64x16xbf16>,
      %c2_75 = arith.constant 2 : index
      %c1_76 = arith.constant 1 : index
      %c0_77 = arith.constant 0 : index
      %96 = vector.load %arg14[%c2_75, %c1_76, %c0_77] : memref<10x10x16xbf16, #tpu.memory_space<vmem>>, vector<8x8x16xbf16>
      %97 = vector.shape_cast %96 : vector<8x8x16xbf16> to vector<64x16xbf16>
      %c0_78 = arith.constant 0 : index
      %c112 = arith.constant 112 : index
      %98 = vector.load %arg15[%c0_78, %c112] : memref<64x144xbf16, #tpu.memory_space<vmem>>, vector<64x16xbf16>
      tpu.vector_store %arg15[%c0_78, %c112], %97 {strides = array<i32>} : memref<64x144xbf16, #tpu.memory_space<vmem>>, vector<64x16xbf16>,
      %c2_79 = arith.constant 2 : index
      %c2_80 = arith.constant 2 : index
      %c0_81 = arith.constant 0 : index
      %99 = vector.load %arg14[%c2_79, %c2_80, %c0_81] : memref<10x10x16xbf16, #tpu.memory_space<vmem>>, vector<8x8x16xbf16>
      %100 = vector.shape_cast %99 : vector<8x8x16xbf16> to vector<64x16xbf16>
      %c0_82 = arith.constant 0 : index
      %c128 = arith.constant 128 : index
      %101 = vector.load %arg15[%c0_82, %c128] : memref<64x144xbf16, #tpu.memory_space<vmem>>, vector<64x16xbf16>
      tpu.vector_store %arg15[%c0_82, %c128], %100 {strides = array<i32>} : memref<64x144xbf16, #tpu.memory_space<vmem>>, vector<64x16xbf16>,
      %c0_83 = arith.constant 0 : index
      %c0_84 = arith.constant 0 : index
      %102 = vector.load %arg5[%c0_83, %c0_84] : memref<16x144xbf16, #tpu.memory_space<vmem>>, vector<16x144xbf16>
      %c0_85 = arith.constant 0 : index
      %c0_86 = arith.constant 0 : index
      %103 = vector.load %arg15[%c0_85, %c0_86] : memref<64x144xbf16, #tpu.memory_space<vmem>>, vector<64x144xbf16>
      %cst_87 = arith.constant dense<0.000000e+00> : vector<16x64xf32>
      %104 = tpu.matmul %102, %103, %cst_87 {dimension_numbers = #tpu.dot_dimension_numbers<[1], [1], [0], [0], [0, 0, 1, 0], [], []>} : vector<16x144xbf16>, vector<64x144xbf16>, vector<16x64xf32> -> vector<16x64xf32>
      %c0_88 = arith.constant 0 : index
      %c0_89 = arith.constant 0 : index
      %105 = vector.load %arg6[%c0_88, %c0_89] : memref<16x1xf32, #tpu.memory_space<vmem>>, vector<16x1xf32>
      %106 = vector.broadcast %105 : vector<16x1xf32> to vector<16x64xf32>
      %107 = arith.addf %104, %106 : vector<16x64xf32>
      %cst_90 = arith.constant 0.000000e+00 : f32
      %108 = vector.broadcast %cst_90 : f32 to vector<16x64xf32>
      %109 = arith.cmpf ogt, %107, %108 : vector<16x64xf32>
      %c0_91 = arith.constant 0 : index
      %110 = memref.load %arg8[%c0_91] : memref<1xf32, #tpu.memory_space<smem>>
      %111 = vector.broadcast %110 : f32 to vector<16x64xf32>
      %112 = arith.mulf %111, %107 : vector<16x64xf32>
      %113 = arith.select %109, %107, %112 : vector<16x64xi1>, vector<16x64xf32>
      %c0_92 = arith.constant 0 : index
      %c0_93 = arith.constant 0 : index
      %c0_94 = arith.constant 0 : index
      %114 = vector.load %arg9[%c0_92, %c0_93, %c0_94] : memref<1x16x64xf32, #tpu.memory_space<vmem>>, vector<1x16x64xf32>
      %115 = vector.shape_cast %114 : vector<1x16x64xf32> to vector<16x64xf32>
      %116 = vector.shape_cast %113 : vector<16x64xf32> to vector<1x16x64xf32>
      tpu.vector_store %arg9[%c0_92, %c0_93, %c0_94], %116 {strides = array<i32>} : memref<1x16x64xf32, #tpu.memory_space<vmem>>, vector<1x16x64xf32>,
    } else {
    }
    return
  }
  func.func @transform_0(%arg0: i32, %arg1: i32) -> (i32, i32, i32) {
    %c0_i32 = arith.constant 0 : i32
    %c0_i32_0 = arith.constant 0 : i32
    %c0_i32_1 = arith.constant 0 : i32
    return %arg0, %c0_i32, %c0_i32_0 : i32, i32, i32
  }
  func.func @transform_1(%arg0: i32, %arg1: i32) -> (i32, i32) {
    %c0_i32 = arith.constant 0 : i32
    %c0_i32_0 = arith.constant 0 : i32
    %c0_i32_1 = arith.constant 0 : i32
    return %c0_i32, %c0_i32_0 : i32, i32
  }
  func.func @transform_2(%arg0: i32, %arg1: i32) -> (i32, i32) {
    %c0_i32 = arith.constant 0 : i32
    %c0_i32_0 = arith.constant 0 : i32
    %c0_i32_1 = arith.constant 0 : i32
    return %c0_i32, %c0_i32_0 : i32, i32
  }
  func.func @transform_3(%arg0: i32, %arg1: i32) -> (i32, i32) {
    %c0_i32 = arith.constant 0 : i32
    %c0_i32_0 = arith.constant 0 : i32
    %c0_i32_1 = arith.constant 0 : i32
    return %c0_i32, %c0_i32_0 : i32, i32
  }
  func.func @transform_4(%arg0: i32, %arg1: i32) -> (i32, i32) {
    %c0_i32 = arith.constant 0 : i32
    %c0_i32_0 = arith.constant 0 : i32
    %c0_i32_1 = arith.constant 0 : i32
    return %c0_i32, %c0_i32_0 : i32, i32
  }
  func.func @transform_5(%arg0: i32, %arg1: i32) -> i32 {
    %c0_i32 = arith.constant 0 : i32
    %c0_i32_0 = arith.constant 0 : i32
    return %c0_i32 : i32
  }
  func.func @transform_6(%arg0: i32, %arg1: i32) -> i32 {
    %c0_i32 = arith.constant 0 : i32
    %c0_i32_0 = arith.constant 0 : i32
    return %c0_i32 : i32
  }
  func.func @transform_7(%arg0: i32, %arg1: i32) -> (i32, i32, i32) {
    %c0_i32 = arith.constant 0 : i32
    %c0_i32_0 = arith.constant 0 : i32
    %c0_i32_1 = arith.constant 0 : i32
    return %arg0, %c0_i32, %c0_i32_0 : i32, i32, i32
  }
}

</mosaic_0001>

<llo_original>
// kernel: tpu_custom_call.1
$region0: #{tpu_custom_call.1}
  #allocation0 [shape = 'u32[]', space=smem, size = 0x4, offset = 0x4, fixed_abs, tag = 'smem constant byte address 0x4 - core index']
  #allocation1 [shape = 'u32[144,128]{1,0:T(1,128)}', space=vmem, size = 0x12000, scoped, tag = 'internal scratch']
  #allocation2 [shape = 'bf16[64,2]{1,0:T(16,128)(2,1)}', space=vmem, size = 0x4000, scoped, tag = 'scratch operand']
  #allocation3 [shape = 'bf16[64,2]{1,0:T(16,128)(2,1)}', space=vmem, size = 0x4000, scoped, tag = 'scratch operand']
  #allocation4 [shape = 'bf16[64,16]{1,0:T(16,128)(2,1)}', space=vmem, size = 0x4000, scoped, tag = 'scratch operand']
  #allocation5 [shape = 'f32[64,16]{1,0:T(8,128)}', space=vmem, size = 0x8000, scoped, tag = 'scratch operand']
  #allocation6 [shape = 'bf16[10,10,16]{2,1,0:T(8,128)(2,1)}', space=vmem, size = 0xa000, scoped, tag = 'scratch operand']
  #allocation7 [shape = 'bf16[64,144]{1,0:T(16,128)(2,1)}', space=vmem, size = 0x8000, scoped, tag = 'scratch operand']
  #allocation8 [shape = 'f32[1]{0:T(128)S(6)}', space=smem, size = 0x200, scoped, tag = 'scoped memory for tpu_custom_call.1']
  #allocation9 [shape = 'f32[1]{0:T(128)S(6)}', space=smem, size = 0x200, scoped, tag = 'scoped memory for tpu_custom_call.1']
  %s0 = inlined_call_operand.hbm [shape: f32[2,16,64], index: 0, kind: input, shape index: {}]
  %s1 = inlined_call_operand.vmem [shape: bf16[16,20], index: 1, kind: input, shape index: {}]
  %s2 = inlined_call_operand.vmem [shape: f32[1,20], index: 2, kind: input, shape index: {}]
  %s3 = inlined_call_operand.vmem [shape: bf16[16,144], index: 3, kind: input, shape index: {}]
  %s4 = inlined_call_operand.vmem [shape: f32[16,1], index: 4, kind: input, shape index: {}]
  %s5 = inlined_call_operand.<no memory space> [shape: f32[1], index: 5, kind: input, shape index: {}]
  %s6 = inlined_call_operand.<no memory space> [shape: f32[1], index: 6, kind: input, shape index: {}]
  %s7 = inlined_call_operand.hbm [shape: f32[2,16,64], index: 7, kind: output, shape index: {}]
  %s8 = sld [smem:[#allocation0]]
  $region73: #{tpu_custom_call.1} parent=0
    _
  %s10 = ssub.s32 1, %s8
  %s11 = scalar_select 0, %s10, %s8
  %12 = sst [smem:[#allocation8]] %s5
  %13 = sst [smem:[#allocation9]] %s6
  $region1: #{tpu_custom_call.1} parent=0
    #allocation10 [shape = 'u8[16384]{0}', space=vmem, size = 0x4000, scoped, tag = 'input window, operand 0']
    #allocation11 [shape = 's32[2]{0}', space=sflag, size = 0x8, scoped, tag = 'scoped memory for tpu_custom_call.1']
    #allocation12 [shape = 's32[2]{0}', space=sflag, size = 0x8, scoped, tag = 'scoped memory for tpu_custom_call.1']
    #allocation13 [shape = 'u8[16384]{0}', space=vmem, size = 0x4000, scoped, tag = 'output window, operand 0']
    %14 = vsyncpa [#allocation11], 0
    %s15 = scalar_lea.sflag [#allocation11], 1
    %16 = vsyncpa %s15, 0
    %17 = vsyncpa [#allocation12], 0
    %s18 = scalar_lea.sflag [#allocation12], 1
    %19 = vsyncpa %s18, 0
    loop: start=0, step=1, limit=4
    $region2: #{tpu_custom_call.1} parent=1 // loop_pre_header
      _
    $region3: #{tpu_custom_call.1} parent=1 // loop_header
      %s21 = sphi 0, %s25
      %p22 = scmp.ge.s32.totalorder %s21, 4
      %s28 = sphi 0, %s40
      %s29 = sphi 0, %s36
      %s30 = sphi 0, %s28
      %s31 = sphi 0, %s29
      %s32 = sphi 0, %s30
      %s33 = sphi 0, %s31
      %s43 = sphi 0, %s45
      %s46 = sphi 0, %s43
      %s47 = sphi 0, %s46
      %s63 = sphi 0, %s47
      %s67 = sphi 0, %s67
      %s69 = sphi 0, %s67
      %s70 = sphi 0, %s69
      %s84 = sphi 0, %s70
      %s88 = sphi 0, %s88
      %s90 = sphi 0, %s88
      %s91 = sphi 0, %s90
      %s105 = sphi 0, %s91
      %s109 = sphi 0, %s109
      %s111 = sphi 0, %s109
      %s112 = sphi 0, %s111
      %s126 = sphi 0, %s112
      %s130 = sphi 0, %s130
      %s132 = sphi 0, %s130
      %s133 = sphi 0, %s132
      %s147 = sphi 0, %s133
      %s151 = sphi 0, %s151
      %s153 = sphi 0, %s151
      %s154 = sphi 0, %s153
      %s168 = sphi 0, %s154
      %s172 = sphi 0, %s172
      %s174 = sphi 0, %s172
      %s175 = sphi 0, %s174
      %s189 = sphi 0, %s175
      %s195 = sphi 0, %s197
      %s198 = sphi 0, %s195
      %s199 = sphi 0, %s198
      %s215 = sphi 0, %s199
    $region4: #{tpu_custom_call.1} parent=1 // loop_header_branch
      %24 = sbr.rel (%p22) target = $region8
    $region5: #{tpu_custom_call.1} parent=1 // loop_body
      %s26 = ssub.s32 %s21, 1
      %s27 = ssub.s32 %s21, 2
      %s34 = sadd.s32 1, %s29
      %p35 = scmp.ge.s32.totalorder %s34, 1
      %s36 = scalar_select %p35, 0, %s34
      %s37 = sadd.s32 1, %s28
      %s38 = scalar_select %p35, %s37, %s28
      %p39 = scmp.ge.s32.totalorder %s38, 2
      %s40 = scalar_select %p39, 0, %s38
      %s41 = ssub.s32 %s28, %s40
      %p42 = scmp.eq.s32.totalorder %s41, 0
      %s44 = sadd.s32 %s43, 1
      %s45 = scalar_select %p42, %s43, %s44
      %p48 = pneg %p42
      %p49 = scmp.eq.s32.totalorder %s21, 1
      %p50 = por %p48, %p49
      %p51 = scmp.ne.s32.totalorder %s43, %s46
      %p52 = scmp.eq.s32.totalorder %s21, 0
      %p53 = por %p51, %p52
      %p54 = scmp.ne.s32.totalorder %s43, %s46
      %p55 = scmp.eq.s32.totalorder %s26, 1
      %p56 = por %p54, %p55
      %p57 = scmp.ne.s32.totalorder %s46, %s47
      %p58 = scmp.eq.s32.totalorder %s26, 0
      %p59 = por %p57, %p58
      %p60 = scmp.ne.s32.totalorder %s46, %s47
      %p61 = scmp.eq.s32.totalorder %s27, 1
      %p62 = por %p60, %p61
      %p64 = scmp.ne.s32.totalorder %s47, %s63
      %p65 = scmp.eq.s32.totalorder %s27, 0
      %p66 = por %p64, %p65
      %s68 = sadd.s32 %s67, 1
      %p71 = scmp.eq.s32.totalorder %s21, 1
      %p72 = scmp.ne.s32.totalorder %s67, %s69
      %p73 = scmp.eq.s32.totalorder %s21, 0
      %p74 = por %p72, %p73
      %p75 = scmp.ne.s32.totalorder %s67, %s69
      %p76 = scmp.eq.s32.totalorder %s26, 1
      %p77 = por %p75, %p76
      %p78 = scmp.ne.s32.totalorder %s69, %s70
      %p79 = scmp.eq.s32.totalorder %s26, 0
      %p80 = por %p78, %p79
      %p81 = scmp.ne.s32.totalorder %s69, %s70
      %p82 = scmp.eq.s32.totalorder %s27, 1
      %p83 = por %p81, %p82
      %p85 = scmp.ne.s32.totalorder %s70, %s84
      %p86 = scmp.eq.s32.totalorder %s27, 0
      %p87 = por %p85, %p86
      %s89 = sadd.s32 %s88, 1
      %p92 = scmp.eq.s32.totalorder %s21, 1
      %p93 = scmp.ne.s32.totalorder %s88, %s90
      %p94 = scmp.eq.s32.totalorder %s21, 0
      %p95 = por %p93, %p94
      %p96 = scmp.ne.s32.totalorder %s88, %s90
      %p97 = scmp.eq.s32.totalorder %s26, 1
      %p98 = por %p96, %p97
      %p99 = scmp.ne.s32.totalorder %s90, %s91
      %p100 = scmp.eq.s32.totalorder %s26, 0
      %p101 = por %p99, %p100
      %p102 = scmp.ne.s32.totalorder %s90, %s91
      %p103 = scmp.eq.s32.totalorder %s27, 1
      %p104 = por %p102, %p103
      %p106 = scmp.ne.s32.totalorder %s91, %s105
      %p107 = scmp.eq.s32.totalorder %s27, 0
      %p108 = por %p106, %p107
      %s110 = sadd.s32 %s109, 1
      %p113 = scmp.eq.s32.totalorder %s21, 1
      %p114 = scmp.ne.s32.totalorder %s109, %s111
      %p115 = scmp.eq.s32.totalorder %s21, 0
      %p116 = por %p114, %p115
      %p117 = scmp.ne.s32.totalorder %s109, %s111
      %p118 = scmp.eq.s32.totalorder %s26, 1
      %p119 = por %p117, %p118
      %p120 = scmp.ne.s32.totalorder %s111, %s112
      %p121 = scmp.eq.s32.totalorder %s26, 0
      %p122 = por %p120, %p121
      %p123 = scmp.ne.s32.totalorder %s111, %s112
      %p124 = scmp.eq.s32.totalorder %s27, 1
      %p125 = por %p123, %p124
      %p127 = scmp.ne.s32.totalorder %s112, %s126
      %p128 = scmp.eq.s32.totalorder %s27, 0
      %p129 = por %p127, %p128
      %s131 = sadd.s32 %s130, 1
      %p134 = scmp.eq.s32.totalorder %s21, 1
      %p135 = scmp.ne.s32.totalorder %s130, %s132
      %p136 = scmp.eq.s32.totalorder %s21, 0
      %p137 = por %p135, %p136
      %p138 = scmp.ne.s32.totalorder %s130, %s132
      %p139 = scmp.eq.s32.totalorder %s26, 1
      %p140 = por %p138, %p139
      %p141 = scmp.ne.s32.totalorder %s132, %s133
      %p142 = scmp.eq.s32.totalorder %s26, 0
      %p143 = por %p141, %p142
      %p144 = scmp.ne.s32.totalorder %s132, %s133
      %p145 = scmp.eq.s32.totalorder %s27, 1
      %p146 = por %p144, %p145
      %p148 = scmp.ne.s32.totalorder %s133, %s147
      %p149 = scmp.eq.s32.totalorder %s27, 0
      %p150 = por %p148, %p149
      %s152 = sadd.s32 %s151, 1
      %p155 = scmp.eq.s32.totalorder %s21, 1
      %p156 = scmp.ne.s32.totalorder %s151, %s153
      %p157 = scmp.eq.s32.totalorder %s21, 0
      %p158 = por %p156, %p157
      %p159 = scmp.ne.s32.totalorder %s151, %s153
      %p160 = scmp.eq.s32.totalorder %s26, 1
      %p161 = por %p159, %p160
      %p162 = scmp.ne.s32.totalorder %s153, %s154
      %p163 = scmp.eq.s32.totalorder %s26, 0
      %p164 = por %p162, %p163
      %p165 = scmp.ne.s32.totalorder %s153, %s154
      %p166 = scmp.eq.s32.totalorder %s27, 1
      %p167 = por %p165, %p166
      %p169 = scmp.ne.s32.totalorder %s154, %s168
      %p170 = scmp.eq.s32.totalorder %s27, 0
      %p171 = por %p169, %p170
      %s173 = sadd.s32 %s172, 1
      %p176 = scmp.eq.s32.totalorder %s21, 1
      %p177 = scmp.ne.s32.totalorder %s172, %s174
      %p178 = scmp.eq.s32.totalorder %s21, 0
      %p179 = por %p177, %p178
      %p180 = scmp.ne.s32.totalorder %s172, %s174
      %p181 = scmp.eq.s32.totalorder %s26, 1
      %p182 = por %p180, %p181
      %p183 = scmp.ne.s32.totalorder %s174, %s175
      %p184 = scmp.eq.s32.totalorder %s26, 0
      %p185 = por %p183, %p184
      %p186 = scmp.ne.s32.totalorder %s174, %s175
      %p187 = scmp.eq.s32.totalorder %s27, 1
      %p188 = por %p186, %p187
      %p190 = scmp.ne.s32.totalorder %s175, %s189
      %p191 = scmp.eq.s32.totalorder %s27, 0
      %p192 = por %p190, %p191
      %s193 = ssub.s32 %s28, %s40
      %p194 = scmp.eq.s32.totalorder %s193, 0
      %s196 = sadd.s32 %s195, 1
      %s197 = scalar_select %p194, %s195, %s196
      %p200 = pneg %p194
      %p201 = scmp.eq.s32.totalorder %s21, 1
      %p202 = por %p200, %p201
      %p203 = scmp.ne.s32.totalorder %s195, %s198
      %p204 = scmp.eq.s32.totalorder %s21, 0
      %p205 = por %p203, %p204
      %p206 = scmp.ne.s32.totalorder %s195, %s198
      %p207 = scmp.eq.s32.totalorder %s26, 1
      %p208 = por %p206, %p207
      %p209 = scmp.ne.s32.totalorder %s198, %s199
      %p210 = scmp.eq.s32.totalorder %s26, 0
      %p211 = por %p209, %p210
      %p212 = scmp.ne.s32.totalorder %s198, %s199
      %p213 = scmp.eq.s32.totalorder %s27, 1
      %p214 = por %p212, %p213
      %p216 = scmp.ne.s32.totalorder %s199, %s215
      %p217 = scmp.eq.s32.totalorder %s27, 0
      %p218 = por %p216, %p217
      %p219 = scmp.le.s32.totalorder 1, %s21
      %p220 = scmp.lt.s32.totalorder %s21, 3
      %p221 = pnand %p219, %p220
      %p222 = pneg %p221
      // Predicated region
      $region9: #{tpu_custom_call.1} parent=5 // pred_check
        _
      $region10: #{tpu_custom_call.1} parent=5 // pred_check_branch
        %224 = sbr.rel (%p221) target = $region12
      $region11: #{tpu_custom_call.1} parent=5 // pred_region
        %s225 = ssub.s32 %s21, 1
        // Predicated region
        $region13: #{tpu_custom_call.1} parent=11 // pred_check
          %p226 = pneg %p80
        $region14: #{tpu_custom_call.1} parent=11 // pred_check_branch
          %228 = sbr.rel (%p226) target = $region16
        $region15: #{tpu_custom_call.1} parent=11 // pred_region
          _
        $region16: #{tpu_custom_call.1} parent=11 // pred_fallthru
          _
        // Predicated region
        $region17: #{tpu_custom_call.1} parent=11 // pred_check
          %p229 = pneg %p101
        $region18: #{tpu_custom_call.1} parent=11 // pred_check_branch
          %231 = sbr.rel (%p229) target = $region20
        $region19: #{tpu_custom_call.1} parent=11 // pred_region
          _
        $region20: #{tpu_custom_call.1} parent=11 // pred_fallthru
          _
        // Predicated region
        $region21: #{tpu_custom_call.1} parent=11 // pred_check
          %p232 = pneg %p122
        $region22: #{tpu_custom_call.1} parent=11 // pred_check_branch
          %234 = sbr.rel (%p232) target = $region24
        $region23: #{tpu_custom_call.1} parent=11 // pred_region
          _
        $region24: #{tpu_custom_call.1} parent=11 // pred_fallthru
          _
        // Predicated region
        $region25: #{tpu_custom_call.1} parent=11 // pred_check
          %p235 = pneg %p143
        $region26: #{tpu_custom_call.1} parent=11 // pred_check_branch
          %237 = sbr.rel (%p235) target = $region28
        $region27: #{tpu_custom_call.1} parent=11 // pred_region
          _
        $region28: #{tpu_custom_call.1} parent=11 // pred_fallthru
          _
        // Predicated region
        $region29: #{tpu_custom_call.1} parent=11 // pred_check
          %p238 = pneg %p164
        $region30: #{tpu_custom_call.1} parent=11 // pred_check_branch
          %240 = sbr.rel (%p238) target = $region32
        $region31: #{tpu_custom_call.1} parent=11 // pred_region
          _
        $region32: #{tpu_custom_call.1} parent=11 // pred_fallthru
          _
        // Predicated region
        $region33: #{tpu_custom_call.1} parent=11 // pred_check
          %p241 = pneg %p185
        $region34: #{tpu_custom_call.1} parent=11 // pred_check_branch
          %243 = sbr.rel (%p241) target = $region36
        $region35: #{tpu_custom_call.1} parent=11 // pred_region
          _
        $region36: #{tpu_custom_call.1} parent=11 // pred_fallthru
          _
      $region12: #{tpu_custom_call.1} parent=5 // pred_fallthru
        _
      %p244 = scmp.lt.s32.totalorder %s21, 2
      // Predicated region
      $region37: #{tpu_custom_call.1} parent=5 // pred_check
        %p245 = pneg %p244
      $region38: #{tpu_custom_call.1} parent=5 // pred_check_branch
        %247 = sbr.rel (%p245) target = $region40
      $region39: #{tpu_custom_call.1} parent=5 // pred_region
        // Predicated region
        $region41: #{tpu_custom_call.1} parent=39 // pred_check
          %p248 = pneg %p53
        $region42: #{tpu_custom_call.1} parent=39 // pred_check_branch
          %250 = sbr.rel (%p248) target = $region44
        $region43: #{tpu_custom_call.1} parent=39 // pred_region
          %s251 = sand.u32 %s43, 1
          %s252 = scalar_lea.sflag [#allocation11], %s251
          %s253 = sand.u32 %s43, 1
          %s254 = smul.addr %s253, 16
          %s255 = scalar_lea.vmem [#allocation10], %s254
          %s257 = ssub.s32 256, 256
          %258 = vsyncadd %s252, %s257
          %s259 = smul.addr %s28, 2
          %s260 = smul.addr %s259, 128
          %s261 = scalar_lea.hbm %s0, %s260
          %s262 = sshll.u32 %s255, 4
          %s263 = int_to_ptr.vmem [resolvable:$true] %s262
          %268 = dma.hbm_to_vmem [thread:$0]  %s261, 256, %s263, %s252, 128, 128, 8
        $region44: #{tpu_custom_call.1} parent=39 // pred_fallthru
          _
      $region40: #{tpu_custom_call.1} parent=5 // pred_fallthru
        _
      %p269 = scmp.le.s32.totalorder 1, %s21
      %p270 = scmp.lt.s32.totalorder %s21, 3
      %p271 = pnand %p269, %p270
      %p272 = pneg %p271
      // Predicated region
      $region45: #{tpu_custom_call.1} parent=5 // pred_check
        _
      $region46: #{tpu_custom_call.1} parent=5 // pred_check_branch
        %274 = sbr.rel (%p271) target = $region48
      $region47: #{tpu_custom_call.1} parent=5 // pred_region
        %s275 = ssub.s32 %s21, 1
        %s276 = sand.u32 %s46, 1
        %s277 = scalar_lea.sflag [#allocation11], %s276
        %s278 = sand.u32 %s46, 1
        %s279 = smul.addr %s278, 16
        %s280 = scalar_lea.vmem [#allocation10], %s279
        // Predicated region
        $region49: #{tpu_custom_call.1} parent=47 // pred_check
          %p281 = pneg %p59
        $region50: #{tpu_custom_call.1} parent=47 // pred_check_branch
          %283 = sbr.rel (%p281) target = $region52
        $region51: #{tpu_custom_call.1} parent=47 // pred_region
          %284 = dma.done %s277, 256
        $region52: #{tpu_custom_call.1} parent=47 // pred_fallthru
          _
        %s285 = sand.u32 %s46, 1
        %s286 = scalar_lea.sflag [#allocation11], %s285
        %s287 = sand.u32 %s46, 1
        %s288 = smul.addr %s287, 16
        %s289 = scalar_lea.vmem [#allocation10], %s288
        %p290 = pneg %p59
        %p291 = pneg %p56
        %p292 = pneg %p80
        %p293 = pneg %p77
        %p294 = pneg %p101
        %p295 = pneg %p98
        %p296 = pneg %p122
        %p297 = pneg %p119
        %p298 = pneg %p143
        %p299 = pneg %p140
        %p300 = pneg %p164
        %p301 = pneg %p161
        %p302 = pneg %p185
        %p303 = pneg %p182
        %p304 = pneg %p211
        %p305 = pneg %p208
        %s306 = sand.u32 %s198, 1
        %s307 = scalar_lea.sflag [#allocation12], %s306
        %s308 = sand.u32 %s198, 1
        %s309 = smul.addr %s308, 16
        %s310 = scalar_lea.vmem [#allocation13], %s309
        %p312 = scmp.eq.s32.totalorder %s31, 0
        // Predicated region
        $region53: #{tpu_custom_call.1} parent=47 // pred_check
          %p313 = pneg %p312
        $region54: #{tpu_custom_call.1} parent=47 // pred_check_branch
          %315 = sbr.rel (%p313) target = $region56
        $region55: #{tpu_custom_call.1} parent=47 // pred_region
          %v316 = vld [vmem:[%s280] sm:$0xff]
          %v317 = vld [vmem:[%s280 + $0x8] sm:$0xff]
          %318 = vxpose.xlu0.b32.start [1/16] %v316, 128
          %319 = vxpose.xlu0.b32.cont [2/16] %v317, 128
          %320 = vxpose.xlu0.b32.cont [3/16] 0.0, 128
          %321 = vxpose.xlu0.b32.cont [4/16] 0.0, 128
          %322 = vxpose.xlu0.b32.cont [5/16] 0.0, 128
          %323 = vxpose.xlu0.b32.cont [6/16] 0.0, 128
          %324 = vxpose.xlu0.b32.cont [7/16] 0.0, 128
          %325 = vxpose.xlu0.b32.cont [8/16] 0.0, 128
          %326 = vxpose.xlu0.b32.cont [9/16] 0.0, 128
          %327 = vxpose.xlu0.b32.cont [10/16] 0.0, 128
          %328 = vxpose.xlu0.b32.cont [11/16] 0.0, 128
          %329 = vxpose.xlu0.b32.cont [12/16] 0.0, 128
          %330 = vxpose.xlu0.b32.cont [13/16] 0.0, 128
          %331 = vxpose.xlu0.b32.cont [14/16] 0.0, 128
          %332 = vxpose.xlu0.b32.cont [15/16] 0.0, 128
          %333 = vxpose.xlu0.b32.end [16/16] 0.0, 128
          %v334 = vpop.trf.xlu0
          %v335 = vpop.trf.xlu0
          %v336 = vpop.trf.xlu0
          %v337 = vpop.trf.xlu0
          %v338 = vpop.trf.xlu0
          %v339 = vpop.trf.xlu0
          %v340 = vpop.trf.xlu0
          %v341 = vpop.trf.xlu0
          %v342 = vpop.trf.xlu0
          %v343 = vpop.trf.xlu0
          %v344 = vpop.trf.xlu0
          %v345 = vpop.trf.xlu0
          %v346 = vpop.trf.xlu0
          %v347 = vpop.trf.xlu0
          %v348 = vpop.trf.xlu0
          %v349 = vpop.trf.xlu0
          %vm350 = vcmask 130048
          %351 = vst.msk [vmem:[#allocation5] sm:$0xff] %vm350, %v334
          %352 = vst.msk [vmem:[#allocation5 + $0x8] sm:$0xff] %vm350, %v335
          %353 = vst.msk [vmem:[#allocation5 + $0x10] sm:$0xff] %vm350, %v336
          %354 = vst.msk [vmem:[#allocation5 + $0x18] sm:$0xff] %vm350, %v337
          %355 = vst.msk [vmem:[#allocation5 + $0x20] sm:$0xff] %vm350, %v338
          %356 = vst.msk [vmem:[#allocation5 + $0x28] sm:$0xff] %vm350, %v339
          %357 = vst.msk [vmem:[#allocation5 + $0x30] sm:$0xff] %vm350, %v340
          %358 = vst.msk [vmem:[#allocation5 + $0x38] sm:$0xff] %vm350, %v341
          %v359 = vpack.c.bf16 %v335, %v334
          %v360 = vpack.c.bf16 %v337, %v336
          %v361 = vpack.c.bf16 %v339, %v338
          %v362 = vpack.c.bf16 %v341, %v340
          %v363 = vld [vmem:[%s1] sm:$0xf]
          %v364 = vld [vmem:[%s1 + $0x4] sm:$0xf]
          %v365 = vld [vmem:[%s2] sm:$0x1]
          %v367 = vlaneseq
          %v368 = vshrl.u32 %v367, 7
          %v369 = vsub.s32 0, %v368
          %v370 = vrot.slane %v365, %v369
          %v374 = vunpack.c.l.b16 %v363
          %v375 = vunpack.c.l.b16 %v364
          %v376 = vpack.c.b16 %v375, %v374
          %v379 = vsel %vm350, %v359, 0
          %v382 = vsel %vm350, %v360, 0
          %v385 = vsel %vm350, %v361, 0
          %v388 = vsel %vm350, %v362, 0
          %390 = vmatprep.subr.bf16.mxu0 0
          %391 = vmatpush1.bf16.msra.mxu0 %v376
          %392 = vmatprep.subr.bf16.mxu0 0
          %393 = vmatpush1.bf16.msra.mxu0 0
          %394 = vmatprep.subr.bf16.mxu0 0
          %395 = vmatpush1.bf16.msra.mxu0 0
          %396 = vmatprep.subr.bf16.mxu0 0
          %397 = vmatpush1.bf16.msra.mxu0 0
          %398 = vmatprep.subr.bf16.mxu0 0
          %399 = vmatpush1.bf16.msra.mxu0 0
          %400 = vmatprep.subr.bf16.mxu0 0
          %401 = vmatpush1.bf16.msra.mxu0 0
          %402 = vmatprep.subr.bf16.mxu0 0
          %403 = vmatpush1.bf16.msra.mxu0 0
          %404 = vmatprep.subr.bf16.mxu0 0
          %405 = vmatpush1.bf16.msra.mxu0 0
          %406 = vmatprep.subr.bf16.mxu0 0
          %407 = vmatpush1.bf16.msra.mxu0 0
          %408 = vmatprep.subr.bf16.mxu0 0
          %409 = vmatpush1.bf16.msra.mxu0 0
          %410 = vmatprep.subr.bf16.mxu0 0
          %411 = vmatpush1.bf16.msra.mxu0 0
          %412 = vmatprep.subr.bf16.mxu0 0
          %413 = vmatpush1.bf16.msra.mxu0 0
          %414 = vmatprep.subr.bf16.mxu0 0
          %415 = vmatpush1.bf16.msra.mxu0 0
          %416 = vmatprep.subr.bf16.mxu0 0
          %417 = vmatpush1.bf16.msra.mxu0 0
          %418 = vmatprep.subr.bf16.mxu0 0
          %419 = vmatpush1.bf16.msra.mxu0 0
          %420 = vmatprep.subr.bf16.mxu0 0
          %421 = vmatpush1.bf16.msra.mxu0 0
          %422 = vmatprep.mubr.bf16.mxu0 0
          %423 = vmatmul.mubr.bf16.gmra.mrb[0].mxu0 %v379
          %v424 = vpop.f32.mrb[0].mxu0
          %v425 = vadd.f32 %v370, %v424
          %v426 = vpop.f32.mrb[0].mxu0
          %v427 = vpop.f32.mrb[0].mxu0
          %v428 = vadd.f32 %v370, %v427
          %v429 = vpop.f32.mrb[0].mxu0
          %430 = vmatprep.mubr.bf16.mxu0 0
          %431 = vmatmul.mubr.bf16.gmra.mrb[0].mxu0 %v382
          %v432 = vpop.f32.mrb[0].mxu0
          %v433 = vadd.f32 %v370, %v432
          %v434 = vpop.f32.mrb[0].mxu0
          %v435 = vpop.f32.mrb[0].mxu0
          %v436 = vadd.f32 %v370, %v435
          %v437 = vpop.f32.mrb[0].mxu0
          %438 = vmatprep.mubr.bf16.mxu0 0
          %439 = vmatmul.mubr.bf16.gmra.mrb[0].mxu0 %v385
          %v440 = vpop.f32.mrb[0].mxu0
          %v441 = vadd.f32 %v370, %v440
          %v442 = vpop.f32.mrb[0].mxu0
          %v443 = vpop.f32.mrb[0].mxu0
          %v444 = vadd.f32 %v370, %v443
          %v445 = vpop.f32.mrb[0].mxu0
          %446 = vmatprep.mubr.bf16.mxu0 0
          %447 = vmatmul.mubr.bf16.gmra.mrb[0].mxu0 %v388
          %v448 = vpop.f32.mrb[0].mxu0
          %v449 = vadd.f32 %v370, %v448
          %v450 = vpop.f32.mrb[0].mxu0
          %v451 = vpop.f32.mrb[0].mxu0
          %v452 = vadd.f32 %v370, %v451
          %v453 = vpop.f32.mrb[0].mxu0
          %454 = vdwg.mxu0
          %v455 = vpack.c.bf16 %v428, %v425
          %v456 = vpack.c.bf16 %v436, %v433
          %v457 = vpack.c.bf16 %v444, %v441
          %v458 = vpack.c.bf16 %v452, %v449
          %vm459 = vcmask 15360
          %460 = vst.msk [vmem:[#allocation2] sm:$0xff] %vm459, %v455
          %461 = vst.msk [vmem:[#allocation2 + $0x8] sm:$0xff] %vm459, %v456
          %462 = vst.msk [vmem:[#allocation2 + $0x10] sm:$0xff] %vm459, %v457
          %463 = vst.msk [vmem:[#allocation2 + $0x18] sm:$0xff] %vm459, %v458
          %468 = vrot.lane.b32.xlu0 %v455, 126
          %v469 = vpop.permute.xlu0 %468
          %470 = vrot.lane.b32.xlu0 %v456, 126
          %v471 = vpop.permute.xlu0 %470
          %472 = vrot.lane.b32.xlu0 %v457, 126
          %v473 = vpop.permute.xlu0 %472
          %474 = vrot.lane.b32.xlu0 %v458, 126
          %v475 = vpop.permute.xlu0 %474
          %480 = vst.msk [vmem:[#allocation3] sm:$0xff] %vm459, %v469
          %481 = vst.msk [vmem:[#allocation3 + $0x8] sm:$0xff] %vm459, %v471
          %482 = vst.msk [vmem:[#allocation3 + $0x10] sm:$0xff] %vm459, %v473
          %483 = vst.msk [vmem:[#allocation3 + $0x18] sm:$0xff] %vm459, %v475
          %484 = vrot.lane.b32.xlu0 %v455, 124
          %v485 = vpop.permute.xlu0 %484
          %486 = vrot.lane.b32.xlu0 %v456, 124
          %v487 = vpop.permute.xlu0 %486
          %488 = vrot.lane.b32.xlu0 %v457, 124
          %v489 = vpop.permute.xlu0 %488
          %490 = vrot.lane.b32.xlu0 %v458, 124
          %v491 = vpop.permute.xlu0 %490
          %496 = vst.msk [vmem:[#allocation4] sm:$0xff] %vm350, %v485
          %497 = vst.msk [vmem:[#allocation4 + $0x8] sm:$0xff] %vm350, %v487
          %498 = vst.msk [vmem:[#allocation4 + $0x10] sm:$0xff] %vm350, %v489
          %499 = vst.msk [vmem:[#allocation4 + $0x18] sm:$0xff] %vm350, %v491
        $region56: #{tpu_custom_call.1} parent=47 // pred_fallthru
          _
        %s500 = smul.u32 %s31, 64
        %s501 = sshra.s32 %s500, 4
        %s502 = sand.u32 %s500, 15
        %s503 = smul.addr %s501, 8
        %s504 = scalar_lea.vmem [#allocation2], %s503
        %v505 = vld [vmem:[%s504] sm:$0xff]
        %v506 = vld [vmem:[%s504 + $0x8] sm:$0xff]
        %v507 = vld [vmem:[%s504 + $0x10] sm:$0xff]
        %v508 = vld [vmem:[%s504 + $0x18] sm:$0xff]
        %v509 = vld [vmem:[#allocation3] sm:$0xff]
        %v510 = vld [vmem:[#allocation3 + $0x8] sm:$0xff]
        %v511 = vld [vmem:[#allocation3 + $0x10] sm:$0xff]
        %v512 = vld [vmem:[#allocation3 + $0x18] sm:$0xff]
        %vm513 = vcmask 15360
        %v515 = vsel %vm513, %v505, 0
        %v518 = vsel %vm513, %v506, 0
        %v521 = vsel %vm513, %v507, 0
        %v524 = vsel %vm513, %v508, 0
        %v527 = vsel %vm513, %v509, 0
        %v530 = vsel %vm513, %v510, 0
        %v533 = vsel %vm513, %v511, 0
        %v536 = vsel %vm513, %v512, 0
        %538 = vmatprep.subr.bf16.mxu0 0
        %539 = vmatpush1.bf16.xpose.msra.mxu0 %v527
        %540 = vmatprep.subr.bf16.mxu0 0
        %541 = vmatpush1.bf16.xpose.msra.mxu0 %v530
        %542 = vmatprep.subr.bf16.mxu0 0
        %543 = vmatpush1.bf16.xpose.msra.mxu0 %v533
        %544 = vmatprep.subr.bf16.mxu0 0
        %545 = vmatpush1.bf16.xpose.msra.mxu0 %v536
        %546 = vmatprep.subr.bf16.mxu0 0
        %547 = vmatpush1.bf16.xpose.msra.mxu0 0
        %548 = vmatprep.subr.bf16.mxu0 0
        %549 = vmatpush1.bf16.xpose.msra.mxu0 0
        %550 = vmatprep.subr.bf16.mxu0 0
        %551 = vmatpush1.bf16.xpose.msra.mxu0 0
        %552 = vmatprep.subr.bf16.mxu0 0
        %553 = vmatpush1.bf16.xpose.msra.mxu0 0
        %554 = vmatprep.subr.bf16.mxu0 0
        %555 = vmatpush1.bf16.xpose.msra.mxu0 0
        %556 = vmatprep.subr.bf16.mxu0 0
        %557 = vmatpush1.bf16.xpose.msra.mxu0 0
        %558 = vmatprep.subr.bf16.mxu0 0
        %559 = vmatpush1.bf16.xpose.msra.mxu0 0
        %560 = vmatprep.subr.bf16.mxu0 0
        %561 = vmatpush1.bf16.xpose.msra.mxu0 0
        %562 = vmatprep.subr.bf16.mxu0 0
        %563 = vmatpush1.bf16.xpose.msra.mxu0 0
        %564 = vmatprep.subr.bf16.mxu0 0
        %565 = vmatpush1.bf16.xpose.msra.mxu0 0
        %566 = vmatprep.subr.bf16.mxu0 0
        %567 = vmatpush1.bf16.xpose.msra.mxu0 0
        %568 = vmatprep.subr.bf16.mxu0 0
        %569 = vmatpush1.bf16.xpose.msra.mxu0 0
        %570 = vmatprep.mubr.bf16.mxu0 0
        %571 = vmatmul.mubr.bf16.gmra.mrb[0].mxu0 %v515
        %v572 = vpop.f32.mrb[0].mxu0
        %v573 = vadd.f32 0.0, %v572
        %v574 = vpop.f32.mrb[0].mxu0
        %v575 = vpop.f32.mrb[0].mxu0
        %v576 = vadd.f32 0.0, %v575
        %v577 = vpop.f32.mrb[0].mxu0
        %578 = vmatprep.mubr.bf16.mxu0 0
        %579 = vmatmul.mubr.bf16.gmra.mrb[0].mxu0 %v518
        %v580 = vpop.f32.mrb[0].mxu0
        %v581 = vadd.f32 0.0, %v580
        %v582 = vpop.f32.mrb[0].mxu0
        %v583 = vpop.f32.mrb[0].mxu0
        %v584 = vadd.f32 0.0, %v583
        %v585 = vpop.f32.mrb[0].mxu0
        %586 = vmatprep.mubr.bf16.mxu0 0
        %587 = vmatmul.mubr.bf16.gmra.mrb[0].mxu0 %v521
        %v588 = vpop.f32.mrb[0].mxu0
        %v589 = vadd.f32 0.0, %v588
        %v590 = vpop.f32.mrb[0].mxu0
        %v591 = vpop.f32.mrb[0].mxu0
        %v592 = vadd.f32 0.0, %v591
        %v593 = vpop.f32.mrb[0].mxu0
        %594 = vmatprep.mubr.bf16.mxu0 0
        %595 = vmatmul.mubr.bf16.gmra.mrb[0].mxu0 %v524
        %v596 = vpop.f32.mrb[0].mxu0
        %v597 = vadd.f32 0.0, %v596
        %v598 = vpop.f32.mrb[0].mxu0
        %v599 = vpop.f32.mrb[0].mxu0
        %v600 = vadd.f32 0.0, %v599
        %v601 = vpop.f32.mrb[0].mxu0
        %602 = vdwg.mxu0
        %vm603 = vcmask 523264
        %v604 = vsel %vm603, %v573, -inf
        %605 = vmax.xlane.f32.xlu0 %v604
        %v606 = vpop.xlane.xlu0 %605
        %v607 = vsel %vm603, %v576, -inf
        %608 = vmax.xlane.f32.xlu0 %v607
        %v609 = vpop.xlane.xlu0 %608
        %v610 = vsel %vm603, %v581, -inf
        %611 = vmax.xlane.f32.xlu0 %v610
        %v612 = vpop.xlane.xlu0 %611
        %v613 = vsel %vm603, %v584, -inf
        %614 = vmax.xlane.f32.xlu0 %v613
        %v615 = vpop.xlane.xlu0 %614
        %v616 = vsel %vm603, %v589, -inf
        %617 = vmax.xlane.f32.xlu0 %v616
        %v618 = vpop.xlane.xlu0 %617
        %v619 = vsel %vm603, %v592, -inf
        %620 = vmax.xlane.f32.xlu0 %v619
        %v621 = vpop.xlane.xlu0 %620
        %v622 = vsel %vm603, %v597, -inf
        %623 = vmax.xlane.f32.xlu0 %v622
        %v624 = vpop.xlane.xlu0 %623
        %v625 = vsel %vm603, %v600, -inf
        %626 = vmax.xlane.f32.xlu0 %v625
        %v627 = vpop.xlane.xlu0 %626
        %v628 = vsub.f32 %v573, %v606
        %v629 = vsub.f32 %v576, %v609
        %v630 = vsub.f32 %v581, %v612
        %v631 = vsub.f32 %v584, %v615
        %v632 = vsub.f32 %v589, %v618
        %v633 = vsub.f32 %v592, %v621
        %v634 = vsub.f32 %v597, %v624
        %v635 = vsub.f32 %v600, %v627
        %v636 = vmul.f32 %v628, 1.442695
        %v637 = vpow.pop %v636
        %v638 = vmul.f32 %v629, 1.442695
        %v639 = vpow.pop %v638
        %v640 = vmul.f32 %v630, 1.442695
        %v641 = vpow.pop %v640
        %v642 = vmul.f32 %v631, 1.442695
        %v643 = vpow.pop %v642
        %v644 = vmul.f32 %v632, 1.442695
        %v645 = vpow.pop %v644
        %v646 = vmul.f32 %v633, 1.442695
        %v647 = vpow.pop %v646
        %v648 = vmul.f32 %v634, 1.442695
        %v649 = vpow.pop %v648
        %v650 = vmul.f32 %v635, 1.442695
        %v651 = vpow.pop %v650
        %v652 = vsel %vm603, %v637, 0.0
        %653 = vadd.xlane.f32.xlu0 %v652
        %v654 = vpop.xlane.xlu0 %653
        %v655 = vsel %vm603, %v639, 0.0
        %656 = vadd.xlane.f32.xlu0 %v655
        %v657 = vpop.xlane.xlu0 %656
        %v658 = vsel %vm603, %v641, 0.0
        %659 = vadd.xlane.f32.xlu0 %v658
        %v660 = vpop.xlane.xlu0 %659
        %v661 = vsel %vm603, %v643, 0.0
        %662 = vadd.xlane.f32.xlu0 %v661
        %v663 = vpop.xlane.xlu0 %662
        %v664 = vsel %vm603, %v645, 0.0
        %665 = vadd.xlane.f32.xlu0 %v664
        %v666 = vpop.xlane.xlu0 %665
        %v667 = vsel %vm603, %v647, 0.0
        %668 = vadd.xlane.f32.xlu0 %v667
        %v669 = vpop.xlane.xlu0 %668
        %v670 = vsel %vm603, %v649, 0.0
        %671 = vadd.xlane.f32.xlu0 %v670
        %v672 = vpop.xlane.xlu0 %671
        %v673 = vsel %vm603, %v651, 0.0
        %674 = vadd.xlane.f32.xlu0 %v673
        %v675 = vpop.xlane.xlu0 %674
        %v676 = vrcp.pop %v654
        %v677 = vrcp.pop %v657
        %v678 = vrcp.pop %v660
        %v679 = vrcp.pop %v663
        %v680 = vrcp.pop %v666
        %v681 = vrcp.pop %v669
        %v682 = vrcp.pop %v672
        %v683 = vrcp.pop %v675
        %v684 = vmul.f32 %v637, %v676
        %v685 = vmul.f32 %v639, %v677
        %v686 = vmul.f32 %v641, %v678
        %v687 = vmul.f32 %v643, %v679
        %v688 = vmul.f32 %v645, %v680
        %v689 = vmul.f32 %v647, %v681
        %v690 = vmul.f32 %v649, %v682
        %v691 = vmul.f32 %v651, %v683
        %v692 = vpack.c.bf16 %v685, %v684
        %v693 = vpack.c.bf16 %v687, %v686
        %v694 = vpack.c.bf16 %v689, %v688
        %v695 = vpack.c.bf16 %v691, %v690
        %v696 = vld [vmem:[#allocation4] sm:$0xff]
        %v697 = vld [vmem:[#allocation4 + $0x8] sm:$0xff]
        %v698 = vld [vmem:[#allocation4 + $0x10] sm:$0xff]
        %v699 = vld [vmem:[#allocation4 + $0x18] sm:$0xff]
        %v701 = vsel %vm603, %v692, 0
        %v704 = vsel %vm603, %v693, 0
        %v707 = vsel %vm603, %v694, 0
        %v710 = vsel %vm603, %v695, 0
        %712 = vmatprep.subr.bf16.mxu0 0
        %713 = vmatpush1.bf16.msra.mxu0 %v696
        %714 = vmatprep.subr.bf16.mxu0 0
        %715 = vmatpush1.bf16.msra.mxu0 %v697
        %716 = vmatprep.subr.bf16.mxu0 0
        %717 = vmatpush1.bf16.msra.mxu0 %v698
        %718 = vmatprep.subr.bf16.mxu0 0
        %719 = vmatpush1.bf16.msra.mxu0 %v699
        %720 = vmatprep.subr.bf16.mxu0 0
        %721 = vmatpush1.bf16.msra.mxu0 0
        %722 = vmatprep.subr.bf16.mxu0 0
        %723 = vmatpush1.bf16.msra.mxu0 0
        %724 = vmatprep.subr.bf16.mxu0 0
        %725 = vmatpush1.bf16.msra.mxu0 0
        %726 = vmatprep.subr.bf16.mxu0 0
        %727 = vmatpush1.bf16.msra.mxu0 0
        %728 = vmatprep.subr.bf16.mxu0 0
        %729 = vmatpush1.bf16.msra.mxu0 0
        %730 = vmatprep.subr.bf16.mxu0 0
        %731 = vmatpush1.bf16.msra.mxu0 0
        %732 = vmatprep.subr.bf16.mxu0 0
        %733 = vmatpush1.bf16.msra.mxu0 0
        %734 = vmatprep.subr.bf16.mxu0 0
        %735 = vmatpush1.bf16.msra.mxu0 0
        %736 = vmatprep.subr.bf16.mxu0 0
        %737 = vmatpush1.bf16.msra.mxu0 0
        %738 = vmatprep.subr.bf16.mxu0 0
        %739 = vmatpush1.bf16.msra.mxu0 0
        %740 = vmatprep.subr.bf16.mxu0 0
        %741 = vmatpush1.bf16.msra.mxu0 0
        %742 = vmatprep.subr.bf16.mxu0 0
        %743 = vmatpush1.bf16.msra.mxu0 0
        %744 = vmatprep.mubr.bf16.mxu0 0
        %745 = vmatmul.mubr.bf16.gmra.mrb[0].mxu0 %v701
        %v746 = vpop.f32.mrb[0].mxu0
        %v747 = vadd.f32 0.0, %v746
        %v748 = vpop.f32.mrb[0].mxu0
        %v749 = vpop.f32.mrb[0].mxu0
        %v750 = vadd.f32 0.0, %v749
        %v751 = vpop.f32.mrb[0].mxu0
        %752 = vmatprep.mubr.bf16.mxu0 0
        %753 = vmatmul.mubr.bf16.gmra.mrb[0].mxu0 %v704
        %v754 = vpop.f32.mrb[0].mxu0
        %v755 = vadd.f32 0.0, %v754
        %v756 = vpop.f32.mrb[0].mxu0
        %v757 = vpop.f32.mrb[0].mxu0
        %v758 = vadd.f32 0.0, %v757
        %v759 = vpop.f32.mrb[0].mxu0
        %760 = vmatprep.mubr.bf16.mxu0 0
        %761 = vmatmul.mubr.bf16.gmra.mrb[0].mxu0 %v707
        %v762 = vpop.f32.mrb[0].mxu0
        %v763 = vadd.f32 0.0, %v762
        %v764 = vpop.f32.mrb[0].mxu0
        %v765 = vpop.f32.mrb[0].mxu0
        %v766 = vadd.f32 0.0, %v765
        %v767 = vpop.f32.mrb[0].mxu0
        %768 = vmatprep.mubr.bf16.mxu0 0
        %769 = vmatmul.mubr.bf16.gmra.mrb[0].mxu0 %v710
        %v770 = vpop.f32.mrb[0].mxu0
        %v771 = vadd.f32 0.0, %v770
        %v772 = vpop.f32.mrb[0].mxu0
        %v773 = vpop.f32.mrb[0].mxu0
        %v774 = vadd.f32 0.0, %v773
        %v775 = vpop.f32.mrb[0].mxu0
        %776 = vdwg.mxu0
        %s777 = sld [smem:[#allocation8]]
        %v778 = vstv %s777
        %v779 = vmul.f32 %v778, %v747
        %v780 = vmul.f32 %v778, %v750
        %v781 = vmul.f32 %v778, %v755
        %v782 = vmul.f32 %v778, %v758
        %v783 = vmul.f32 %v778, %v763
        %v784 = vmul.f32 %v778, %v766
        %v785 = vmul.f32 %v778, %v771
        %v786 = vmul.f32 %v778, %v774
        %s787 = scalar_lea.vmem [#allocation5], %s500
        %v788 = vld [vmem:[%s787] sm:$0xff]
        %v789 = vld [vmem:[%s787 + $0x8] sm:$0xff]
        %v790 = vld [vmem:[%s787 + $0x10] sm:$0xff]
        %v791 = vld [vmem:[%s787 + $0x18] sm:$0xff]
        %v792 = vld [vmem:[%s787 + $0x20] sm:$0xff]
        %v793 = vld [vmem:[%s787 + $0x28] sm:$0xff]
        %v794 = vld [vmem:[%s787 + $0x30] sm:$0xff]
        %v795 = vld [vmem:[%s787 + $0x38] sm:$0xff]
        %v796 = vadd.f32 %v779, %v788
        %v797 = vadd.f32 %v780, %v789
        %v798 = vadd.f32 %v781, %v790
        %v799 = vadd.f32 %v782, %v791
        %v800 = vadd.f32 %v783, %v792
        %v801 = vadd.f32 %v784, %v793
        %v802 = vadd.f32 %v785, %v794
        %v803 = vadd.f32 %v786, %v795
        %vm804 = vcmask 130048
        %805 = vst.msk [vmem:[%s787] sm:$0xff] %vm804, %v796
        %806 = vst.msk [vmem:[%s787 + $0x8] sm:$0xff] %vm804, %v797
        %807 = vst.msk [vmem:[%s787 + $0x10] sm:$0xff] %vm804, %v798
        %808 = vst.msk [vmem:[%s787 + $0x18] sm:$0xff] %vm804, %v799
        %809 = vst.msk [vmem:[%s787 + $0x20] sm:$0xff] %vm804, %v800
        %810 = vst.msk [vmem:[%s787 + $0x28] sm:$0xff] %vm804, %v801
        %811 = vst.msk [vmem:[%s787 + $0x30] sm:$0xff] %vm804, %v802
        %812 = vst.msk [vmem:[%s787 + $0x38] sm:$0xff] %vm804, %v803
        // Predicated region
        $region57: #{tpu_custom_call.1} parent=47 // pred_check
          %p813 = pneg %p312
        $region58: #{tpu_custom_call.1} parent=47 // pred_check_branch
          %815 = sbr.rel (%p813) target = $region60
        $region59: #{tpu_custom_call.1} parent=47 // pred_region
          %vm816 = vcmask 125952
          %817 = vst.msk [vmem:[#allocation6] sm:$0xf] %vm816, 0
          %vm818 = vcmask 122880
          %819 = vst.msk [vmem:[#allocation6 + $0x4] sm:$0x1] %vm818, 0
          %820 = vst.msk [vmem:[#allocation6 + $0x8] sm:$0xf] %vm816, 0
          %821 = vst.msk [vmem:[#allocation6 + $0xc] sm:$0x1] %vm818, 0
          %822 = vst.msk [vmem:[#allocation6 + $0x10] sm:$0xf] %vm816, 0
          %823 = vst.msk [vmem:[#allocation6 + $0x14] sm:$0x1] %vm818, 0
          %824 = vst.msk [vmem:[#allocation6 + $0x18] sm:$0xf] %vm816, 0
          %825 = vst.msk [vmem:[#allocation6 + $0x1c] sm:$0x1] %vm818, 0
          %826 = vst.msk [vmem:[#allocation6 + $0x20] sm:$0xf] %vm816, 0
          %827 = vst.msk [vmem:[#allocation6 + $0x24] sm:$0x1] %vm818, 0
          %828 = vst.msk [vmem:[#allocation6 + $0x28] sm:$0xf] %vm816, 0
          %829 = vst.msk [vmem:[#allocation6 + $0x2c] sm:$0x1] %vm818, 0
          %830 = vst.msk [vmem:[#allocation6 + $0x30] sm:$0xf] %vm816, 0
          %831 = vst.msk [vmem:[#allocation6 + $0x34] sm:$0x1] %vm818, 0
          %832 = vst.msk [vmem:[#allocation6 + $0x38] sm:$0xf] %vm816, 0
          %833 = vst.msk [vmem:[#allocation6 + $0x3c] sm:$0x1] %vm818, 0
          %834 = vst.msk [vmem:[#allocation6 + $0x40] sm:$0xf] %vm816, 0
          %835 = vst.msk [vmem:[#allocation6 + $0x44] sm:$0x1] %vm818, 0
          %836 = vst.msk [vmem:[#allocation6 + $0x48] sm:$0xf] %vm816, 0
          %837 = vst.msk [vmem:[#allocation6 + $0x4c] sm:$0x1] %vm818, 0
          %v838 = vld [vmem:[#allocation5] sm:$0xff]
          %v839 = vpack.c.bf16 %v838, %v838
          %v841 = vunpack.c.l.b16 %v839
          %v842 = vpack.c.b16 %v841, %v841
          %v844 = vshrl.u32 %v842, 16
          %v846 = vrot.slane %v844, 7
          %v847 = vshll.u32 %v842, 16
          %v849 = vor.u32 %v846, %v847
          %v850 = vrot.slane %v846, 4
          %s853 = scalar_lea.vmem [#allocation6], 8
          %vm854 = vcmask 125952
          %vm855 = vsmask.f32 7938
          %vm856 = vmand %vm854, %vm855
          %v857 = vld [vmem:[%s853] sm:$0xf]
          %v858 = vsel %vm856, %v849, %v857
          %859 = vst [vmem:[%s853] sm:$0xf] %v858
          %vm860 = vcmask 122880
          %vm861 = vsmask.f32 256
          %vm862 = vmand %vm860, %vm861
          %v863 = vld [vmem:[%s853 + $0x4] sm:$0x1]
          %v864 = vsel %vm862, %v850, %v863
          %865 = vst [vmem:[%s853 + $0x4] sm:$0x1] %v864
          %v866 = vld [vmem:[#allocation5 + $0x8] sm:$0xff]
          %v867 = vpack.c.bf16 %v866, %v866
          %v869 = vunpack.c.l.b16 %v867
          %v870 = vpack.c.b16 %v869, %v869
          %v872 = vshrl.u32 %v870, 16
          %v874 = vrot.slane %v872, 7
          %v875 = vshll.u32 %v870, 16
          %v877 = vor.u32 %v874, %v875
          %v878 = vrot.slane %v874, 4
          %s881 = scalar_lea.vmem [#allocation6], 16
          %v882 = vld [vmem:[%s881] sm:$0xf]
          %v883 = vsel %vm856, %v877, %v882
          %884 = vst [vmem:[%s881] sm:$0xf] %v883
          %v885 = vld [vmem:[%s881 + $0x4] sm:$0x1]
          %v886 = vsel %vm862, %v878, %v885
          %887 = vst [vmem:[%s881 + $0x4] sm:$0x1] %v886
          %v888 = vld [vmem:[#allocation5 + $0x10] sm:$0xff]
          %v889 = vpack.c.bf16 %v888, %v888
          %v891 = vunpack.c.l.b16 %v889
          %v892 = vpack.c.b16 %v891, %v891
          %v894 = vshrl.u32 %v892, 16
          %v896 = vrot.slane %v894, 7
          %v897 = vshll.u32 %v892, 16
          %v899 = vor.u32 %v896, %v897
          %v900 = vrot.slane %v896, 4
          %s903 = scalar_lea.vmem [#allocation6], 24
          %v904 = vld [vmem:[%s903] sm:$0xf]
          %v905 = vsel %vm856, %v899, %v904
          %906 = vst [vmem:[%s903] sm:$0xf] %v905
          %v907 = vld [vmem:[%s903 + $0x4] sm:$0x1]
          %v908 = vsel %vm862, %v900, %v907
          %909 = vst [vmem:[%s903 + $0x4] sm:$0x1] %v908
          %v910 = vld [vmem:[#allocation5 + $0x18] sm:$0xff]
          %v911 = vpack.c.bf16 %v910, %v910
          %v913 = vunpack.c.l.b16 %v911
          %v914 = vpack.c.b16 %v913, %v913
          %v916 = vshrl.u32 %v914, 16
          %v918 = vrot.slane %v916, 7
          %v919 = vshll.u32 %v914, 16
          %v921 = vor.u32 %v918, %v919
          %v922 = vrot.slane %v918, 4
          %s925 = scalar_lea.vmem [#allocation6], 32
          %v926 = vld [vmem:[%s925] sm:$0xf]
          %v927 = vsel %vm856, %v921, %v926
          %928 = vst [vmem:[%s925] sm:$0xf] %v927
          %v929 = vld [vmem:[%s925 + $0x4] sm:$0x1]
          %v930 = vsel %vm862, %v922, %v929
          %931 = vst [vmem:[%s925 + $0x4] sm:$0x1] %v930
          %v932 = vld [vmem:[#allocation5 + $0x20] sm:$0xff]
          %v933 = vpack.c.bf16 %v932, %v932
          %v935 = vunpack.c.l.b16 %v933
          %v936 = vpack.c.b16 %v935, %v935
          %v938 = vshrl.u32 %v936, 16
          %v940 = vrot.slane %v938, 7
          %v941 = vshll.u32 %v936, 16
          %v943 = vor.u32 %v940, %v941
          %v944 = vrot.slane %v940, 4
          %s947 = scalar_lea.vmem [#allocation6], 40
          %v948 = vld [vmem:[%s947] sm:$0xf]
          %v949 = vsel %vm856, %v943, %v948
          %950 = vst [vmem:[%s947] sm:$0xf] %v949
          %v951 = vld [vmem:[%s947 + $0x4] sm:$0x1]
          %v952 = vsel %vm862, %v944, %v951
          %953 = vst [vmem:[%s947 + $0x4] sm:$0x1] %v952
          %v954 = vld [vmem:[#allocation5 + $0x28] sm:$0xff]
          %v955 = vpack.c.bf16 %v954, %v954
          %v957 = vunpack.c.l.b16 %v955
          %v958 = vpack.c.b16 %v957, %v957
          %v960 = vshrl.u32 %v958, 16
          %v962 = vrot.slane %v960, 7
          %v963 = vshll.u32 %v958, 16
          %v965 = vor.u32 %v962, %v963
          %v966 = vrot.slane %v962, 4
          %s969 = scalar_lea.vmem [#allocation6], 48
          %v970 = vld [vmem:[%s969] sm:$0xf]
          %v971 = vsel %vm856, %v965, %v970
          %972 = vst [vmem:[%s969] sm:$0xf] %v971
          %v973 = vld [vmem:[%s969 + $0x4] sm:$0x1]
          %v974 = vsel %vm862, %v966, %v973
          %975 = vst [vmem:[%s969 + $0x4] sm:$0x1] %v974
          %v976 = vld [vmem:[#allocation5 + $0x30] sm:$0xff]
          %v977 = vpack.c.bf16 %v976, %v976
          %v979 = vunpack.c.l.b16 %v977
          %v980 = vpack.c.b16 %v979, %v979
          %v982 = vshrl.u32 %v980, 16
          %v984 = vrot.slane %v982, 7
          %v985 = vshll.u32 %v980, 16
          %v987 = vor.u32 %v984, %v985
          %v988 = vrot.slane %v984, 4
          %s991 = scalar_lea.vmem [#allocation6], 56
          %v992 = vld [vmem:[%s991] sm:$0xf]
          %v993 = vsel %vm856, %v987, %v992
          %994 = vst [vmem:[%s991] sm:$0xf] %v993
          %v995 = vld [vmem:[%s991 + $0x4] sm:$0x1]
          %v996 = vsel %vm862, %v988, %v995
          %997 = vst [vmem:[%s991 + $0x4] sm:$0x1] %v996
          %v998 = vld [vmem:[#allocation5 + $0x38] sm:$0xff]
          %v999 = vpack.c.bf16 %v998, %v998
          %v1001 = vunpack.c.l.b16 %v999
          %v1002 = vpack.c.b16 %v1001, %v1001
          %v1004 = vshrl.u32 %v1002, 16
          %v1006 = vrot.slane %v1004, 7
          %v1007 = vshll.u32 %v1002, 16
          %v1009 = vor.u32 %v1006, %v1007
          %v1010 = vrot.slane %v1006, 4
          %s1013 = scalar_lea.vmem [#allocation6], 64
          %v1014 = vld [vmem:[%s1013] sm:$0xf]
          %v1015 = vsel %vm856, %v1009, %v1014
          %1016 = vst [vmem:[%s1013] sm:$0xf] %v1015
          %v1017 = vld [vmem:[%s1013 + $0x4] sm:$0x1]
          %v1018 = vsel %vm862, %v1010, %v1017
          %1019 = vst [vmem:[%s1013 + $0x4] sm:$0x1] %v1018
          %v1020 = vld [vmem:[#allocation6] sm:$0xf]
          %v1021 = vld [vmem:[#allocation6 + $0x8] sm:$0xf]
          %v1022 = vld [vmem:[#allocation6 + $0x10] sm:$0xf]
          %v1023 = vld [vmem:[#allocation6 + $0x18] sm:$0xf]
          %v1024 = vld [vmem:[#allocation6 + $0x20] sm:$0xf]
          %v1025 = vld [vmem:[#allocation6 + $0x28] sm:$0xf]
          %v1026 = vld [vmem:[#allocation6 + $0x30] sm:$0xf]
          %v1027 = vld [vmem:[#allocation6 + $0x38] sm:$0xf]
          %v1036 = vunpack.c.l.b16 %v1020
          %v1037 = vunpack.c.l.b16 %v1021
          %v1038 = vunpack.c.l.b16 %v1022
          %v1039 = vunpack.c.l.b16 %v1023
          %v1040 = vunpack.c.l.b16 %v1024
          %v1041 = vunpack.c.l.b16 %v1025
          %v1042 = vunpack.c.l.b16 %v1026
          %v1043 = vunpack.c.l.b16 %v1027
          %v1044 = vpack.c.b16 %v1037, %v1036
          %v1045 = vpack.c.b16 %v1039, %v1038
          %v1046 = vpack.c.b16 %v1041, %v1040
          %v1047 = vpack.c.b16 %v1043, %v1042
          %1052 = vst.msk [vmem:[#allocation7] sm:$0xff] %vm804, %v1044
          %1053 = vst.msk [vmem:[#allocation7 + $0x10] sm:$0xff] %vm804, %v1045
          %1054 = vst.msk [vmem:[#allocation7 + $0x20] sm:$0xff] %vm804, %v1046
          %1055 = vst.msk [vmem:[#allocation7 + $0x30] sm:$0xff] %vm804, %v1047
          %v1056 = vld [vmem:[#allocation6] sm:$0xf]
          %v1057 = vld [vmem:[#allocation6 + $0x4] sm:$0x1]
          %v1058 = vld [vmem:[#allocation6 + $0x8] sm:$0xf]
          %v1059 = vld [vmem:[#allocation6 + $0xc] sm:$0x1]
          %v1060 = vld [vmem:[#allocation6 + $0x10] sm:$0xf]
          %v1061 = vld [vmem:[#allocation6 + $0x14] sm:$0x1]
          %v1062 = vld [vmem:[#allocation6 + $0x18] sm:$0xf]
          %v1063 = vld [vmem:[#allocation6 + $0x1c] sm:$0x1]
          %v1064 = vld [vmem:[#allocation6 + $0x20] sm:$0xf]
          %v1065 = vld [vmem:[#allocation6 + $0x24] sm:$0x1]
          %v1066 = vld [vmem:[#allocation6 + $0x28] sm:$0xf]
          %v1067 = vld [vmem:[#allocation6 + $0x2c] sm:$0x1]
          %v1068 = vld [vmem:[#allocation6 + $0x30] sm:$0xf]
          %v1069 = vld [vmem:[#allocation6 + $0x34] sm:$0x1]
          %v1070 = vld [vmem:[#allocation6 + $0x38] sm:$0xf]
          %v1071 = vld [vmem:[#allocation6 + $0x3c] sm:$0x1]
          %vm1072 = vsmask.f32 3328
          %vm1073 = vsmask.f32 7440
          %vm1074 = vmor %vm1072, %vm1073
          %v1076 = vshrl.u32 %v1056, 16
          %v1078 = vrot.slane %v1076, 4
          %v1079 = vshll.u32 %v1056, 16
          %v1081 = vrot.slane %v1079, 5
          %v1082 = vor.u32 %v1078, %v1081
          %v1083 = vrot.slane %v1082, 4
          %v1085 = vshll.u32 %v1057, 16
          %v1087 = vrot.slane %v1085, 5
          %v1088 = vsel %vm1074, %v1083, %v1087
          %v1090 = vshrl.u32 %v1058, 16
          %v1092 = vrot.slane %v1090, 4
          %v1093 = vshll.u32 %v1058, 16
          %v1095 = vrot.slane %v1093, 5
          %v1096 = vor.u32 %v1092, %v1095
          %v1097 = vrot.slane %v1096, 4
          %v1099 = vshll.u32 %v1059, 16
          %v1101 = vrot.slane %v1099, 5
          %v1102 = vsel %vm1074, %v1097, %v1101
          %v1104 = vshrl.u32 %v1060, 16
          %v1106 = vrot.slane %v1104, 4
          %v1107 = vshll.u32 %v1060, 16
          %v1109 = vrot.slane %v1107, 5
          %v1110 = vor.u32 %v1106, %v1109
          %v1111 = vrot.slane %v1110, 4
          %v1113 = vshll.u32 %v1061, 16
          %v1115 = vrot.slane %v1113, 5
          %v1116 = vsel %vm1074, %v1111, %v1115
          %v1118 = vshrl.u32 %v1062, 16
          %v1120 = vrot.slane %v1118, 4
          %v1121 = vshll.u32 %v1062, 16
          %v1123 = vrot.slane %v1121, 5
          %v1124 = vor.u32 %v1120, %v1123
          %v1125 = vrot.slane %v1124, 4
          %v1127 = vshll.u32 %v1063, 16
          %v1129 = vrot.slane %v1127, 5
          %v1130 = vsel %vm1074, %v1125, %v1129
          %v1132 = vshrl.u32 %v1064, 16
          %v1134 = vrot.slane %v1132, 4
          %v1135 = vshll.u32 %v1064, 16
          %v1137 = vrot.slane %v1135, 5
          %v1138 = vor.u32 %v1134, %v1137
          %v1139 = vrot.slane %v1138, 4
          %v1141 = vshll.u32 %v1065, 16
          %v1143 = vrot.slane %v1141, 5
          %v1144 = vsel %vm1074, %v1139, %v1143
          %v1146 = vshrl.u32 %v1066, 16
          %v1148 = vrot.slane %v1146, 4
          %v1149 = vshll.u32 %v1066, 16
          %v1151 = vrot.slane %v1149, 5
          %v1152 = vor.u32 %v1148, %v1151
          %v1153 = vrot.slane %v1152, 4
          %v1155 = vshll.u32 %v1067, 16
          %v1157 = vrot.slane %v1155, 5
          %v1158 = vsel %vm1074, %v1153, %v1157
          %v1160 = vshrl.u32 %v1068, 16
          %v1162 = vrot.slane %v1160, 4
          %v1163 = vshll.u32 %v1068, 16
          %v1165 = vrot.slane %v1163, 5
          %v1166 = vor.u32 %v1162, %v1165
          %v1167 = vrot.slane %v1166, 4
          %v1169 = vshll.u32 %v1069, 16
          %v1171 = vrot.slane %v1169, 5
          %v1172 = vsel %vm1074, %v1167, %v1171
          %v1174 = vshrl.u32 %v1070, 16
          %v1176 = vrot.slane %v1174, 4
          %v1177 = vshll.u32 %v1070, 16
          %v1179 = vrot.slane %v1177, 5
          %v1180 = vor.u32 %v1176, %v1179
          %v1181 = vrot.slane %v1180, 4
          %v1183 = vshll.u32 %v1071, 16
          %v1185 = vrot.slane %v1183, 5
          %v1186 = vsel %vm1074, %v1181, %v1185
          %v1187 = vunpack.c.l.b16 %v1088
          %v1188 = vunpack.c.l.b16 %v1102
          %v1189 = vunpack.c.l.b16 %v1116
          %v1190 = vunpack.c.l.b16 %v1130
          %v1191 = vunpack.c.l.b16 %v1144
          %v1192 = vunpack.c.l.b16 %v1158
          %v1193 = vunpack.c.l.b16 %v1172
          %v1194 = vunpack.c.l.b16 %v1186
          %v1195 = vpack.c.b16 %v1188, %v1187
          %v1196 = vpack.c.b16 %v1190, %v1189
          %v1197 = vpack.c.b16 %v1192, %v1191
          %v1198 = vpack.c.b16 %v1194, %v1193
          %1199 = vrot.lane.b32.xlu0 %v1195, 16
          %v1200 = vpop.permute.xlu0 %1199
          %1201 = vrot.lane.b32.xlu0 %v1196, 16
          %v1202 = vpop.permute.xlu0 %1201
          %1203 = vrot.lane.b32.xlu0 %v1197, 16
          %v1204 = vpop.permute.xlu0 %1203
          %1205 = vrot.lane.b32.xlu0 %v1198, 16
          %v1206 = vpop.permute.xlu0 %1205
          %vm1211 = vcmask 261248
          %1212 = vst.msk [vmem:[#allocation7] sm:$0xff] %vm1211, %v1200
          %1213 = vst.msk [vmem:[#allocation7 + $0x10] sm:$0xff] %vm1211, %v1202
          %1214 = vst.msk [vmem:[#allocation7 + $0x20] sm:$0xff] %vm1211, %v1204
          %1215 = vst.msk [vmem:[#allocation7 + $0x30] sm:$0xff] %vm1211, %v1206
          %v1216 = vld [vmem:[#allocation6] sm:$0xe]
          %v1217 = vld [vmem:[#allocation6 + $0x4] sm:$0x1]
          %v1218 = vld [vmem:[#allocation6 + $0x8] sm:$0xe]
          %v1219 = vld [vmem:[#allocation6 + $0xc] sm:$0x1]
          %v1220 = vld [vmem:[#allocation6 + $0x10] sm:$0xe]
          %v1221 = vld [vmem:[#allocation6 + $0x14] sm:$0x1]
          %v1222 = vld [vmem:[#allocation6 + $0x18] sm:$0xe]
          %v1223 = vld [vmem:[#allocation6 + $0x1c] sm:$0x1]
          %v1224 = vld [vmem:[#allocation6 + $0x20] sm:$0xe]
          %v1225 = vld [vmem:[#allocation6 + $0x24] sm:$0x1]
          %v1226 = vld [vmem:[#allocation6 + $0x28] sm:$0xe]
          %v1227 = vld [vmem:[#allocation6 + $0x2c] sm:$0x1]
          %v1228 = vld [vmem:[#allocation6 + $0x30] sm:$0xe]
          %v1229 = vld [vmem:[#allocation6 + $0x34] sm:$0x1]
          %v1230 = vld [vmem:[#allocation6 + $0x38] sm:$0xe]
          %v1231 = vld [vmem:[#allocation6 + $0x3c] sm:$0x1]
          %vm1248 = vcmask 1042432
          %vm1249 = vcmask 1046532
          %vm1250 = vmor %vm1248, %vm1249
          %v1251 = vrot.slane %v1216, 5
          %v1252 = vrot.slane %v1251, 4
          %v1253 = vrot.slane %v1217, 5
          %v1254 = vsel %vm1250, %v1252, %v1253
          %v1255 = vrot.slane %v1218, 5
          %v1256 = vrot.slane %v1255, 4
          %v1257 = vrot.slane %v1219, 5
          %v1258 = vsel %vm1250, %v1256, %v1257
          %v1259 = vrot.slane %v1220, 5
          %v1260 = vrot.slane %v1259, 4
          %v1261 = vrot.slane %v1221, 5
          %v1262 = vsel %vm1250, %v1260, %v1261
          %v1263 = vrot.slane %v1222, 5
          %v1264 = vrot.slane %v1263, 4
          %v1265 = vrot.slane %v1223, 5
          %v1266 = vsel %vm1250, %v1264, %v1265
          %v1267 = vrot.slane %v1224, 5
          %v1268 = vrot.slane %v1267, 4
          %v1269 = vrot.slane %v1225, 5
          %v1270 = vsel %vm1250, %v1268, %v1269
          %v1271 = vrot.slane %v1226, 5
          %v1272 = vrot.slane %v1271, 4
          %v1273 = vrot.slane %v1227, 5
          %v1274 = vsel %vm1250, %v1272, %v1273
          %v1275 = vrot.slane %v1228, 5
          %v1276 = vrot.slane %v1275, 4
          %v1277 = vrot.slane %v1229, 5
          %v1278 = vsel %vm1250, %v1276, %v1277
          %v1279 = vrot.slane %v1230, 5
          %v1280 = vrot.slane %v1279, 4
          %v1281 = vrot.slane %v1231, 5
          %v1282 = vsel %vm1250, %v1280, %v1281
          %v1283 = vunpack.c.l.b16 %v1254
          %v1284 = vunpack.c.l.b16 %v1258
          %v1285 = vunpack.c.l.b16 %v1262
          %v1286 = vunpack.c.l.b16 %v1266
          %v1287 = vunpack.c.l.b16 %v1270
          %v1288 = vunpack.c.l.b16 %v1274
          %v1289 = vunpack.c.l.b16 %v1278
          %v1290 = vunpack.c.l.b16 %v1282
          %v1291 = vpack.c.b16 %v1284, %v1283
          %v1292 = vpack.c.b16 %v1286, %v1285
          %v1293 = vpack.c.b16 %v1288, %v1287
          %v1294 = vpack.c.b16 %v1290, %v1289
          %1295 = vrot.lane.b32.xlu0 %v1291, 32
          %v1296 = vpop.permute.xlu0 %1295
          %1297 = vrot.lane.b32.xlu0 %v1292, 32
          %v1298 = vpop.permute.xlu0 %1297
          %1299 = vrot.lane.b32.xlu0 %v1293, 32
          %v1300 = vpop.permute.xlu0 %1299
          %1301 = vrot.lane.b32.xlu0 %v1294, 32
          %v1302 = vpop.permute.xlu0 %1301
          %vm1307 = vcmask 392448
          %1308 = vst.msk [vmem:[#allocation7] sm:$0xff] %vm1307, %v1296
          %1309 = vst.msk [vmem:[#allocation7 + $0x10] sm:$0xff] %vm1307, %v1298
          %1310 = vst.msk [vmem:[#allocation7 + $0x20] sm:$0xff] %vm1307, %v1300
          %1311 = vst.msk [vmem:[#allocation7 + $0x30] sm:$0xff] %vm1307, %v1302
          %v1312 = vld [vmem:[%s853] sm:$0xf]
          %v1313 = vld [vmem:[%s853 + $0x8] sm:$0xf]
          %v1314 = vld [vmem:[%s853 + $0x10] sm:$0xf]
          %v1315 = vld [vmem:[%s853 + $0x18] sm:$0xf]
          %v1316 = vld [vmem:[%s853 + $0x20] sm:$0xf]
          %v1317 = vld [vmem:[%s853 + $0x28] sm:$0xf]
          %v1318 = vld [vmem:[%s853 + $0x30] sm:$0xf]
          %v1319 = vld [vmem:[%s853 + $0x38] sm:$0xf]
          %v1328 = vunpack.c.l.b16 %v1312
          %v1329 = vunpack.c.l.b16 %v1313
          %v1330 = vunpack.c.l.b16 %v1314
          %v1331 = vunpack.c.l.b16 %v1315
          %v1332 = vunpack.c.l.b16 %v1316
          %v1333 = vunpack.c.l.b16 %v1317
          %v1334 = vunpack.c.l.b16 %v1318
          %v1335 = vunpack.c.l.b16 %v1319
          %v1336 = vpack.c.b16 %v1329, %v1328
          %v1337 = vpack.c.b16 %v1331, %v1330
          %v1338 = vpack.c.b16 %v1333, %v1332
          %v1339 = vpack.c.b16 %v1335, %v1334
          %1340 = vrot.lane.b32.xlu0 %v1336, 48
          %v1341 = vpop.permute.xlu0 %1340
          %1342 = vrot.lane.b32.xlu0 %v1337, 48
          %v1343 = vpop.permute.xlu0 %1342
          %1344 = vrot.lane.b32.xlu0 %v1338, 48
          %v1345 = vpop.permute.xlu0 %1344
          %1346 = vrot.lane.b32.xlu0 %v1339, 48
          %v1347 = vpop.permute.xlu0 %1346
          %vm1352 = vcmask 523648
          %1353 = vst.msk [vmem:[#allocation7] sm:$0xff] %vm1352, %v1341
          %1354 = vst.msk [vmem:[#allocation7 + $0x10] sm:$0xff] %vm1352, %v1343
          %1355 = vst.msk [vmem:[#allocation7 + $0x20] sm:$0xff] %vm1352, %v1345
          %1356 = vst.msk [vmem:[#allocation7 + $0x30] sm:$0xff] %vm1352, %v1347
          %v1357 = vld [vmem:[%s853] sm:$0xf]
          %v1358 = vld [vmem:[%s853 + $0x4] sm:$0x1]
          %v1359 = vld [vmem:[%s853 + $0x8] sm:$0xf]
          %v1360 = vld [vmem:[%s853 + $0xc] sm:$0x1]
          %v1361 = vld [vmem:[%s853 + $0x10] sm:$0xf]
          %v1362 = vld [vmem:[%s853 + $0x14] sm:$0x1]
          %v1363 = vld [vmem:[%s853 + $0x18] sm:$0xf]
          %v1364 = vld [vmem:[%s853 + $0x1c] sm:$0x1]
          %v1365 = vld [vmem:[%s853 + $0x20] sm:$0xf]
          %v1366 = vld [vmem:[%s853 + $0x24] sm:$0x1]
          %v1367 = vld [vmem:[%s853 + $0x28] sm:$0xf]
          %v1368 = vld [vmem:[%s853 + $0x2c] sm:$0x1]
          %v1369 = vld [vmem:[%s853 + $0x30] sm:$0xf]
          %v1370 = vld [vmem:[%s853 + $0x34] sm:$0x1]
          %v1371 = vld [vmem:[%s853 + $0x38] sm:$0xf]
          %v1372 = vld [vmem:[%s853 + $0x3c] sm:$0x1]
          %v1374 = vshrl.u32 %v1357, 16
          %v1376 = vrot.slane %v1374, 4
          %v1377 = vshll.u32 %v1357, 16
          %v1379 = vrot.slane %v1377, 5
          %v1380 = vor.u32 %v1376, %v1379
          %v1381 = vrot.slane %v1380, 4
          %v1383 = vshll.u32 %v1358, 16
          %v1385 = vrot.slane %v1383, 5
          %v1386 = vsel %vm1074, %v1381, %v1385
          %v1388 = vshrl.u32 %v1359, 16
          %v1390 = vrot.slane %v1388, 4
          %v1391 = vshll.u32 %v1359, 16
          %v1393 = vrot.slane %v1391, 5
          %v1394 = vor.u32 %v1390, %v1393
          %v1395 = vrot.slane %v1394, 4
          %v1397 = vshll.u32 %v1360, 16
          %v1399 = vrot.slane %v1397, 5
          %v1400 = vsel %vm1074, %v1395, %v1399
          %v1402 = vshrl.u32 %v1361, 16
          %v1404 = vrot.slane %v1402, 4
          %v1405 = vshll.u32 %v1361, 16
          %v1407 = vrot.slane %v1405, 5
          %v1408 = vor.u32 %v1404, %v1407
          %v1409 = vrot.slane %v1408, 4
          %v1411 = vshll.u32 %v1362, 16
          %v1413 = vrot.slane %v1411, 5
          %v1414 = vsel %vm1074, %v1409, %v1413
          %v1416 = vshrl.u32 %v1363, 16
          %v1418 = vrot.slane %v1416, 4
          %v1419 = vshll.u32 %v1363, 16
          %v1421 = vrot.slane %v1419, 5
          %v1422 = vor.u32 %v1418, %v1421
          %v1423 = vrot.slane %v1422, 4
          %v1425 = vshll.u32 %v1364, 16
          %v1427 = vrot.slane %v1425, 5
          %v1428 = vsel %vm1074, %v1423, %v1427
          %v1430 = vshrl.u32 %v1365, 16
          %v1432 = vrot.slane %v1430, 4
          %v1433 = vshll.u32 %v1365, 16
          %v1435 = vrot.slane %v1433, 5
          %v1436 = vor.u32 %v1432, %v1435
          %v1437 = vrot.slane %v1436, 4
          %v1439 = vshll.u32 %v1366, 16
          %v1441 = vrot.slane %v1439, 5
          %v1442 = vsel %vm1074, %v1437, %v1441
          %v1444 = vshrl.u32 %v1367, 16
          %v1446 = vrot.slane %v1444, 4
          %v1447 = vshll.u32 %v1367, 16
          %v1449 = vrot.slane %v1447, 5
          %v1450 = vor.u32 %v1446, %v1449
          %v1451 = vrot.slane %v1450, 4
          %v1453 = vshll.u32 %v1368, 16
          %v1455 = vrot.slane %v1453, 5
          %v1456 = vsel %vm1074, %v1451, %v1455
          %v1458 = vshrl.u32 %v1369, 16
          %v1460 = vrot.slane %v1458, 4
          %v1461 = vshll.u32 %v1369, 16
          %v1463 = vrot.slane %v1461, 5
          %v1464 = vor.u32 %v1460, %v1463
          %v1465 = vrot.slane %v1464, 4
          %v1467 = vshll.u32 %v1370, 16
          %v1469 = vrot.slane %v1467, 5
          %v1470 = vsel %vm1074, %v1465, %v1469
          %v1472 = vshrl.u32 %v1371, 16
          %v1474 = vrot.slane %v1472, 4
          %v1475 = vshll.u32 %v1371, 16
          %v1477 = vrot.slane %v1475, 5
          %v1478 = vor.u32 %v1474, %v1477
          %v1479 = vrot.slane %v1478, 4
          %v1481 = vshll.u32 %v1372, 16
          %v1483 = vrot.slane %v1481, 5
          %v1484 = vsel %vm1074, %v1479, %v1483
          %v1485 = vunpack.c.l.b16 %v1386
          %v1486 = vunpack.c.l.b16 %v1400
          %v1487 = vunpack.c.l.b16 %v1414
          %v1488 = vunpack.c.l.b16 %v1428
          %v1489 = vunpack.c.l.b16 %v1442
          %v1490 = vunpack.c.l.b16 %v1456
          %v1491 = vunpack.c.l.b16 %v1470
          %v1492 = vunpack.c.l.b16 %v1484
          %v1493 = vpack.c.b16 %v1486, %v1485
          %v1494 = vpack.c.b16 %v1488, %v1487
          %v1495 = vpack.c.b16 %v1490, %v1489
          %v1496 = vpack.c.b16 %v1492, %v1491
          %1497 = vrot.lane.b32.xlu0 %v1493, 64
          %v1498 = vpop.permute.xlu0 %1497
          %1499 = vrot.lane.b32.xlu0 %v1494, 64
          %v1500 = vpop.permute.xlu0 %1499
          %1501 = vrot.lane.b32.xlu0 %v1495, 64
          %v1502 = vpop.permute.xlu0 %1501
          %1503 = vrot.lane.b32.xlu0 %v1496, 64
          %v1504 = vpop.permute.xlu0 %1503
          %vm1509 = vcmask 654848
          %1510 = vst.msk [vmem:[#allocation7] sm:$0xff] %vm1509, %v1498
          %1511 = vst.msk [vmem:[#allocation7 + $0x10] sm:$0xff] %vm1509, %v1500
          %1512 = vst.msk [vmem:[#allocation7 + $0x20] sm:$0xff] %vm1509, %v1502
          %1513 = vst.msk [vmem:[#allocation7 + $0x30] sm:$0xff] %vm1509, %v1504
          %v1514 = vld [vmem:[%s853] sm:$0xe]
          %v1515 = vld [vmem:[%s853 + $0x4] sm:$0x1]
          %v1516 = vld [vmem:[%s853 + $0x8] sm:$0xe]
          %v1517 = vld [vmem:[%s853 + $0xc] sm:$0x1]
          %v1518 = vld [vmem:[%s853 + $0x10] sm:$0xe]
          %v1519 = vld [vmem:[%s853 + $0x14] sm:$0x1]
          %v1520 = vld [vmem:[%s853 + $0x18] sm:$0xe]
          %v1521 = vld [vmem:[%s853 + $0x1c] sm:$0x1]
          %v1522 = vld [vmem:[%s853 + $0x20] sm:$0xe]
          %v1523 = vld [vmem:[%s853 + $0x24] sm:$0x1]
          %v1524 = vld [vmem:[%s853 + $0x28] sm:$0xe]
          %v1525 = vld [vmem:[%s853 + $0x2c] sm:$0x1]
          %v1526 = vld [vmem:[%s853 + $0x30] sm:$0xe]
          %v1527 = vld [vmem:[%s853 + $0x34] sm:$0x1]
          %v1528 = vld [vmem:[%s853 + $0x38] sm:$0xe]
          %v1529 = vld [vmem:[%s853 + $0x3c] sm:$0x1]
          %v1546 = vrot.slane %v1514, 5
          %v1547 = vrot.slane %v1546, 4
          %v1548 = vrot.slane %v1515, 5
          %v1549 = vsel %vm1250, %v1547, %v1548
          %v1550 = vrot.slane %v1516, 5
          %v1551 = vrot.slane %v1550, 4
          %v1552 = vrot.slane %v1517, 5
          %v1553 = vsel %vm1250, %v1551, %v1552
          %v1554 = vrot.slane %v1518, 5
          %v1555 = vrot.slane %v1554, 4
          %v1556 = vrot.slane %v1519, 5
          %v1557 = vsel %vm1250, %v1555, %v1556
          %v1558 = vrot.slane %v1520, 5
          %v1559 = vrot.slane %v1558, 4
          %v1560 = vrot.slane %v1521, 5
          %v1561 = vsel %vm1250, %v1559, %v1560
          %v1562 = vrot.slane %v1522, 5
          %v1563 = vrot.slane %v1562, 4
          %v1564 = vrot.slane %v1523, 5
          %v1565 = vsel %vm1250, %v1563, %v1564
          %v1566 = vrot.slane %v1524, 5
          %v1567 = vrot.slane %v1566, 4
          %v1568 = vrot.slane %v1525, 5
          %v1569 = vsel %vm1250, %v1567, %v1568
          %v1570 = vrot.slane %v1526, 5
          %v1571 = vrot.slane %v1570, 4
          %v1572 = vrot.slane %v1527, 5
          %v1573 = vsel %vm1250, %v1571, %v1572
          %v1574 = vrot.slane %v1528, 5
          %v1575 = vrot.slane %v1574, 4
          %v1576 = vrot.slane %v1529, 5
          %v1577 = vsel %vm1250, %v1575, %v1576
          %v1578 = vunpack.c.l.b16 %v1549
          %v1579 = vunpack.c.l.b16 %v1553
          %v1580 = vunpack.c.l.b16 %v1557
          %v1581 = vunpack.c.l.b16 %v1561
          %v1582 = vunpack.c.l.b16 %v1565
          %v1583 = vunpack.c.l.b16 %v1569
          %v1584 = vunpack.c.l.b16 %v1573
          %v1585 = vunpack.c.l.b16 %v1577
          %v1586 = vpack.c.b16 %v1579, %v1578
          %v1587 = vpack.c.b16 %v1581, %v1580
          %v1588 = vpack.c.b16 %v1583, %v1582
          %v1589 = vpack.c.b16 %v1585, %v1584
          %1590 = vrot.lane.b32.xlu0 %v1586, 80
          %v1591 = vpop.permute.xlu0 %1590
          %1592 = vrot.lane.b32.xlu0 %v1587, 80
          %v1593 = vpop.permute.xlu0 %1592
          %1594 = vrot.lane.b32.xlu0 %v1588, 80
          %v1595 = vpop.permute.xlu0 %1594
          %1596 = vrot.lane.b32.xlu0 %v1589, 80
          %v1597 = vpop.permute.xlu0 %1596
          %vm1602 = vcmask 786048
          %1603 = vst.msk [vmem:[#allocation7] sm:$0xff] %vm1602, %v1591
          %1604 = vst.msk [vmem:[#allocation7 + $0x10] sm:$0xff] %vm1602, %v1593
          %1605 = vst.msk [vmem:[#allocation7 + $0x20] sm:$0xff] %vm1602, %v1595
          %1606 = vst.msk [vmem:[#allocation7 + $0x30] sm:$0xff] %vm1602, %v1597
          %v1607 = vld [vmem:[%s881] sm:$0xf]
          %v1608 = vld [vmem:[%s881 + $0x8] sm:$0xf]
          %v1609 = vld [vmem:[%s881 + $0x10] sm:$0xf]
          %v1610 = vld [vmem:[%s881 + $0x18] sm:$0xf]
          %v1611 = vld [vmem:[%s881 + $0x20] sm:$0xf]
          %v1612 = vld [vmem:[%s881 + $0x28] sm:$0xf]
          %v1613 = vld [vmem:[%s881 + $0x30] sm:$0xf]
          %v1614 = vld [vmem:[%s881 + $0x38] sm:$0xf]
          %v1623 = vunpack.c.l.b16 %v1607
          %v1624 = vunpack.c.l.b16 %v1608
          %v1625 = vunpack.c.l.b16 %v1609
          %v1626 = vunpack.c.l.b16 %v1610
          %v1627 = vunpack.c.l.b16 %v1611
          %v1628 = vunpack.c.l.b16 %v1612
          %v1629 = vunpack.c.l.b16 %v1613
          %v1630 = vunpack.c.l.b16 %v1614
          %v1631 = vpack.c.b16 %v1624, %v1623
          %v1632 = vpack.c.b16 %v1626, %v1625
          %v1633 = vpack.c.b16 %v1628, %v1627
          %v1634 = vpack.c.b16 %v1630, %v1629
          %1635 = vrot.lane.b32.xlu0 %v1631, 96
          %v1636 = vpop.permute.xlu0 %1635
          %1637 = vrot.lane.b32.xlu0 %v1632, 96
          %v1638 = vpop.permute.xlu0 %1637
          %1639 = vrot.lane.b32.xlu0 %v1633, 96
          %v1640 = vpop.permute.xlu0 %1639
          %1641 = vrot.lane.b32.xlu0 %v1634, 96
          %v1642 = vpop.permute.xlu0 %1641
          %vm1647 = vcmask 917248
          %1648 = vst.msk [vmem:[#allocation7] sm:$0xff] %vm1647, %v1636
          %1649 = vst.msk [vmem:[#allocation7 + $0x10] sm:$0xff] %vm1647, %v1638
          %1650 = vst.msk [vmem:[#allocation7 + $0x20] sm:$0xff] %vm1647, %v1640
          %1651 = vst.msk [vmem:[#allocation7 + $0x30] sm:$0xff] %vm1647, %v1642
          %v1652 = vld [vmem:[%s881] sm:$0xf]
          %v1653 = vld [vmem:[%s881 + $0x4] sm:$0x1]
          %v1654 = vld [vmem:[%s881 + $0x8] sm:$0xf]
          %v1655 = vld [vmem:[%s881 + $0xc] sm:$0x1]
          %v1656 = vld [vmem:[%s881 + $0x10] sm:$0xf]
          %v1657 = vld [vmem:[%s881 + $0x14] sm:$0x1]
          %v1658 = vld [vmem:[%s881 + $0x18] sm:$0xf]
          %v1659 = vld [vmem:[%s881 + $0x1c] sm:$0x1]
          %v1660 = vld [vmem:[%s881 + $0x20] sm:$0xf]
          %v1661 = vld [vmem:[%s881 + $0x24] sm:$0x1]
          %v1662 = vld [vmem:[%s881 + $0x28] sm:$0xf]
          %v1663 = vld [vmem:[%s881 + $0x2c] sm:$0x1]
          %v1664 = vld [vmem:[%s881 + $0x30] sm:$0xf]
          %v1665 = vld [vmem:[%s881 + $0x34] sm:$0x1]
          %v1666 = vld [vmem:[%s881 + $0x38] sm:$0xf]
          %v1667 = vld [vmem:[%s881 + $0x3c] sm:$0x1]
          %v1669 = vshrl.u32 %v1652, 16
          %v1671 = vrot.slane %v1669, 4
          %v1672 = vshll.u32 %v1652, 16
          %v1674 = vrot.slane %v1672, 5
          %v1675 = vor.u32 %v1671, %v1674
          %v1676 = vrot.slane %v1675, 4
          %v1678 = vshll.u32 %v1653, 16
          %v1680 = vrot.slane %v1678, 5
          %v1681 = vsel %vm1074, %v1676, %v1680
          %v1683 = vshrl.u32 %v1654, 16
          %v1685 = vrot.slane %v1683, 4
          %v1686 = vshll.u32 %v1654, 16
          %v1688 = vrot.slane %v1686, 5
          %v1689 = vor.u32 %v1685, %v1688
          %v1690 = vrot.slane %v1689, 4
          %v1692 = vshll.u32 %v1655, 16
          %v1694 = vrot.slane %v1692, 5
          %v1695 = vsel %vm1074, %v1690, %v1694
          %v1697 = vshrl.u32 %v1656, 16
          %v1699 = vrot.slane %v1697, 4
          %v1700 = vshll.u32 %v1656, 16
          %v1702 = vrot.slane %v1700, 5
          %v1703 = vor.u32 %v1699, %v1702
          %v1704 = vrot.slane %v1703, 4
          %v1706 = vshll.u32 %v1657, 16
          %v1708 = vrot.slane %v1706, 5
          %v1709 = vsel %vm1074, %v1704, %v1708
          %v1711 = vshrl.u32 %v1658, 16
          %v1713 = vrot.slane %v1711, 4
          %v1714 = vshll.u32 %v1658, 16
          %v1716 = vrot.slane %v1714, 5
          %v1717 = vor.u32 %v1713, %v1716
          %v1718 = vrot.slane %v1717, 4
          %v1720 = vshll.u32 %v1659, 16
          %v1722 = vrot.slane %v1720, 5
          %v1723 = vsel %vm1074, %v1718, %v1722
          %v1725 = vshrl.u32 %v1660, 16
          %v1727 = vrot.slane %v1725, 4
          %v1728 = vshll.u32 %v1660, 16
          %v1730 = vrot.slane %v1728, 5
          %v1731 = vor.u32 %v1727, %v1730
          %v1732 = vrot.slane %v1731, 4
          %v1734 = vshll.u32 %v1661, 16
          %v1736 = vrot.slane %v1734, 5
          %v1737 = vsel %vm1074, %v1732, %v1736
          %v1739 = vshrl.u32 %v1662, 16
          %v1741 = vrot.slane %v1739, 4
          %v1742 = vshll.u32 %v1662, 16
          %v1744 = vrot.slane %v1742, 5
          %v1745 = vor.u32 %v1741, %v1744
          %v1746 = vrot.slane %v1745, 4
          %v1748 = vshll.u32 %v1663, 16
          %v1750 = vrot.slane %v1748, 5
          %v1751 = vsel %vm1074, %v1746, %v1750
          %v1753 = vshrl.u32 %v1664, 16
          %v1755 = vrot.slane %v1753, 4
          %v1756 = vshll.u32 %v1664, 16
          %v1758 = vrot.slane %v1756, 5
          %v1759 = vor.u32 %v1755, %v1758
          %v1760 = vrot.slane %v1759, 4
          %v1762 = vshll.u32 %v1665, 16
          %v1764 = vrot.slane %v1762, 5
          %v1765 = vsel %vm1074, %v1760, %v1764
          %v1767 = vshrl.u32 %v1666, 16
          %v1769 = vrot.slane %v1767, 4
          %v1770 = vshll.u32 %v1666, 16
          %v1772 = vrot.slane %v1770, 5
          %v1773 = vor.u32 %v1769, %v1772
          %v1774 = vrot.slane %v1773, 4
          %v1776 = vshll.u32 %v1667, 16
          %v1778 = vrot.slane %v1776, 5
          %v1779 = vsel %vm1074, %v1774, %v1778
          %v1780 = vunpack.c.l.b16 %v1681
          %v1781 = vunpack.c.l.b16 %v1695
          %v1782 = vunpack.c.l.b16 %v1709
          %v1783 = vunpack.c.l.b16 %v1723
          %v1784 = vunpack.c.l.b16 %v1737
          %v1785 = vunpack.c.l.b16 %v1751
          %v1786 = vunpack.c.l.b16 %v1765
          %v1787 = vunpack.c.l.b16 %v1779
          %v1788 = vpack.c.b16 %v1781, %v1780
          %v1789 = vpack.c.b16 %v1783, %v1782
          %v1790 = vpack.c.b16 %v1785, %v1784
          %v1791 = vpack.c.b16 %v1787, %v1786
          %1792 = vrot.lane.b32.xlu0 %v1788, 112
          %v1793 = vpop.permute.xlu0 %1792
          %1794 = vrot.lane.b32.xlu0 %v1789, 112
          %v1795 = vpop.permute.xlu0 %1794
          %1796 = vrot.lane.b32.xlu0 %v1790, 112
          %v1797 = vpop.permute.xlu0 %1796
          %1798 = vrot.lane.b32.xlu0 %v1791, 112
          %v1799 = vpop.permute.xlu0 %1798
          %vm1804 = vcmask 1048448
          %1805 = vst.msk [vmem:[#allocation7] sm:$0xff] %vm1804, %v1793
          %1806 = vst.msk [vmem:[#allocation7 + $0x10] sm:$0xff] %vm1804, %v1795
          %1807 = vst.msk [vmem:[#allocation7 + $0x20] sm:$0xff] %vm1804, %v1797
          %1808 = vst.msk [vmem:[#allocation7 + $0x30] sm:$0xff] %vm1804, %v1799
          %v1809 = vld [vmem:[%s881] sm:$0xe]
          %v1810 = vld [vmem:[%s881 + $0x4] sm:$0x1]
          %v1811 = vld [vmem:[%s881 + $0x8] sm:$0xe]
          %v1812 = vld [vmem:[%s881 + $0xc] sm:$0x1]
          %v1813 = vld [vmem:[%s881 + $0x10] sm:$0xe]
          %v1814 = vld [vmem:[%s881 + $0x14] sm:$0x1]
          %v1815 = vld [vmem:[%s881 + $0x18] sm:$0xe]
          %v1816 = vld [vmem:[%s881 + $0x1c] sm:$0x1]
          %v1817 = vld [vmem:[%s881 + $0x20] sm:$0xe]
          %v1818 = vld [vmem:[%s881 + $0x24] sm:$0x1]
          %v1819 = vld [vmem:[%s881 + $0x28] sm:$0xe]
          %v1820 = vld [vmem:[%s881 + $0x2c] sm:$0x1]
          %v1821 = vld [vmem:[%s881 + $0x30] sm:$0xe]
          %v1822 = vld [vmem:[%s881 + $0x34] sm:$0x1]
          %v1823 = vld [vmem:[%s881 + $0x38] sm:$0xe]
          %v1824 = vld [vmem:[%s881 + $0x3c] sm:$0x1]
          %v1841 = vrot.slane %v1809, 5
          %v1842 = vrot.slane %v1841, 4
          %v1843 = vrot.slane %v1810, 5
          %v1844 = vsel %vm1250, %v1842, %v1843
          %v1845 = vrot.slane %v1811, 5
          %v1846 = vrot.slane %v1845, 4
          %v1847 = vrot.slane %v1812, 5
          %v1848 = vsel %vm1250, %v1846, %v1847
          %v1849 = vrot.slane %v1813, 5
          %v1850 = vrot.slane %v1849, 4
          %v1851 = vrot.slane %v1814, 5
          %v1852 = vsel %vm1250, %v1850, %v1851
          %v1853 = vrot.slane %v1815, 5
          %v1854 = vrot.slane %v1853, 4
          %v1855 = vrot.slane %v1816, 5
          %v1856 = vsel %vm1250, %v1854, %v1855
          %v1857 = vrot.slane %v1817, 5
          %v1858 = vrot.slane %v1857, 4
          %v1859 = vrot.slane %v1818, 5
          %v1860 = vsel %vm1250, %v1858, %v1859
          %v1861 = vrot.slane %v1819, 5
          %v1862 = vrot.slane %v1861, 4
          %v1863 = vrot.slane %v1820, 5
          %v1864 = vsel %vm1250, %v1862, %v1863
          %v1865 = vrot.slane %v1821, 5
          %v1866 = vrot.slane %v1865, 4
          %v1867 = vrot.slane %v1822, 5
          %v1868 = vsel %vm1250, %v1866, %v1867
          %v1869 = vrot.slane %v1823, 5
          %v1870 = vrot.slane %v1869, 4
          %v1871 = vrot.slane %v1824, 5
          %v1872 = vsel %vm1250, %v1870, %v1871
          %v1873 = vunpack.c.l.b16 %v1844
          %v1874 = vunpack.c.l.b16 %v1848
          %v1875 = vunpack.c.l.b16 %v1852
          %v1876 = vunpack.c.l.b16 %v1856
          %v1877 = vunpack.c.l.b16 %v1860
          %v1878 = vunpack.c.l.b16 %v1864
          %v1879 = vunpack.c.l.b16 %v1868
          %v1880 = vunpack.c.l.b16 %v1872
          %v1881 = vpack.c.b16 %v1874, %v1873
          %v1882 = vpack.c.b16 %v1876, %v1875
          %v1883 = vpack.c.b16 %v1878, %v1877
          %v1884 = vpack.c.b16 %v1880, %v1879
          %1889 = vst.msk [vmem:[#allocation7 + $0x8] sm:$0xff] %vm804, %v1881
          %1890 = vst.msk [vmem:[#allocation7 + $0x18] sm:$0xff] %vm804, %v1882
          %1891 = vst.msk [vmem:[#allocation7 + $0x28] sm:$0xff] %vm804, %v1883
          %1892 = vst.msk [vmem:[#allocation7 + $0x38] sm:$0xff] %vm804, %v1884
          %v1893 = vld [vmem:[%s3] sm:$0xff]
          %v1894 = vld [vmem:[%s3 + $0x8] sm:$0xff]
          %v1895 = vld [vmem:[#allocation7] sm:$0xff]
          %v1896 = vld [vmem:[#allocation7 + $0x8] sm:$0xff]
          %v1897 = vld [vmem:[#allocation7 + $0x10] sm:$0xff]
          %v1898 = vld [vmem:[#allocation7 + $0x18] sm:$0xff]
          %v1899 = vld [vmem:[#allocation7 + $0x20] sm:$0xff]
          %v1900 = vld [vmem:[#allocation7 + $0x28] sm:$0xff]
          %v1901 = vld [vmem:[#allocation7 + $0x30] sm:$0xff]
          %v1902 = vld [vmem:[#allocation7 + $0x38] sm:$0xff]
          %v1903 = vld [vmem:[%s4] sm:$0xff]
          %v1904 = vld [vmem:[%s4 + $0x8] sm:$0xff]
          %1906 = vset.pattern.permute.xlu0 0
          %1907 = vperm.xlu0 %1906, %v1903
          %v1908 = vpop.permute.xlu0 %1907
          %1911 = vset.pattern.permute.xlu0 0
          %1912 = vperm.xlu0 %1911, %v1904
          %v1913 = vpop.permute.xlu0 %1912
          %v1917 = vunpack.c.l.b16 %v1893
          %v1918 = vunpack.c.h.b16 %v1893
          %v1919 = vunpack.c.l.b16 %v1894
          %v1920 = vunpack.c.h.b16 %v1894
          %v1921 = vpack.c.b16 %v1919, %v1917
          %v1922 = vpack.c.b16 %v1920, %v1918
          %v1925 = vsel %vm804, %v1922, 0
          %v1928 = vsel %vm804, %v1896, 0
          %v1931 = vsel %vm804, %v1898, 0
          %v1934 = vsel %vm804, %v1900, 0
          %v1937 = vsel %vm804, %v1902, 0
          %1939 = vmatprep.subr.bf16.mxu0 %v1928
          %1940 = vmatpush1.bf16.xpose.msra.mxu0 %v1895
          %1941 = vmatprep.subr.bf16.mxu0 %v1931
          %1942 = vmatpush1.bf16.xpose.msra.mxu0 %v1897
          %1943 = vmatprep.subr.bf16.mxu0 %v1934
          %1944 = vmatpush1.bf16.xpose.msra.mxu0 %v1899
          %1945 = vmatprep.subr.bf16.mxu0 %v1937
          %1946 = vmatpush1.bf16.xpose.msra.mxu0 %v1901
          %1947 = vmatprep.subr.bf16.mxu0 0
          %1948 = vmatpush1.bf16.xpose.msra.mxu0 0
          %1949 = vmatprep.subr.bf16.mxu0 0
          %1950 = vmatpush1.bf16.xpose.msra.mxu0 0
          %1951 = vmatprep.subr.bf16.mxu0 0
          %1952 = vmatpush1.bf16.xpose.msra.mxu0 0
          %1953 = vmatprep.subr.bf16.mxu0 0
          %1954 = vmatpush1.bf16.xpose.msra.mxu0 0
          %1955 = vmatprep.subr.bf16.mxu0 0
          %1956 = vmatpush1.bf16.xpose.msra.mxu0 0
          %1957 = vmatprep.subr.bf16.mxu0 0
          %1958 = vmatpush1.bf16.xpose.msra.mxu0 0
          %1959 = vmatprep.subr.bf16.mxu0 0
          %1960 = vmatpush1.bf16.xpose.msra.mxu0 0
          %1961 = vmatprep.subr.bf16.mxu0 0
          %1962 = vmatpush1.bf16.xpose.msra.mxu0 0
          %1963 = vmatprep.subr.bf16.mxu0 0
          %1964 = vmatpush1.bf16.xpose.msra.mxu0 0
          %1965 = vmatprep.subr.bf16.mxu0 0
          %1966 = vmatpush1.bf16.xpose.msra.mxu0 0
          %1967 = vmatprep.subr.bf16.mxu0 0
          %1968 = vmatpush1.bf16.xpose.msra.mxu0 0
          %1969 = vmatprep.subr.bf16.mxu0 0
          %1970 = vmatpush1.bf16.xpose.msra.mxu0 0
          %1971 = vmatprep.mubr.bf16.mxu0 %v1925
          %1972 = vmatmul.mubr.bf16.gmra.mrb[0].mxu0 %v1921
          %v1973 = vpop.f32.mrb[0].mxu0
          %v1974 = vadd.f32 %v1908, %v1973
          %v1975 = vpop.f32.mrb[0].mxu0
          %v1976 = vpop.f32.mrb[0].mxu0
          %v1977 = vadd.f32 %v1913, %v1976
          %v1978 = vpop.f32.mrb[0].mxu0
          %1979 = vdwg.mxu0
          %vm1980 = vcmp.gt.f32.partialorder %v1974, 0.0
          %vm1981 = vcmp.gt.f32.partialorder %v1977, 0.0
          %s1982 = sld [smem:[#allocation9]]
          %v1983 = vstv %s1982
          %v1984 = vmul.f32 %v1983, %v1974
          %v1985 = vmul.f32 %v1983, %v1977
          %v1986 = vsel %vm1980, %v1974, %v1984
          %v1987 = vsel %vm1981, %v1977, %v1985
          %1988 = vst.msk [vmem:[%s310] sm:$0xff] %vm603, %v1986
          %1989 = vst.msk [vmem:[%s310 + $0x8] sm:$0xff] %vm603, %v1987
        $region60: #{tpu_custom_call.1} parent=47 // pred_fallthru
          _
        %s1990 = sand.u32 %s198, 1
        %s1991 = scalar_lea.sflag [#allocation12], %s1990
        %s1992 = sand.u32 %s198, 1
        %s1993 = smul.addr %s1992, 16
        %s1994 = scalar_lea.vmem [#allocation13], %s1993
        // Predicated region
        $region61: #{tpu_custom_call.1} parent=47 // pred_check
          %p1995 = pneg %p208
        $region62: #{tpu_custom_call.1} parent=47 // pred_check_branch
          %1997 = sbr.rel (%p1995) target = $region64
        $region63: #{tpu_custom_call.1} parent=47 // pred_region
          %s1999 = ssub.s32 256, 256
          %2000 = vsyncadd %s1991, %s1999
          %s2001 = smul.addr %s30, 2
          %s2002 = smul.addr %s2001, 128
          %s2003 = scalar_lea.hbm %s7, %s2002
          %s2004 = sshll.u32 %s1994, 4
          %s2005 = int_to_ptr.vmem [resolvable:$true] %s2004
          %2010 = dma.vmem_to_hbm [thread:$0]  %s2005, 256, %s2003, %s1991, 128, 128, 8
        $region64: #{tpu_custom_call.1} parent=47 // pred_fallthru
          _
      $region48: #{tpu_custom_call.1} parent=5 // pred_fallthru
        _
      %p2011 = scmp.le.s32.totalorder 2, %s21
      // Predicated region
      $region65: #{tpu_custom_call.1} parent=5 // pred_check
        %p2012 = pneg %p2011
      $region66: #{tpu_custom_call.1} parent=5 // pred_check_branch
        %2014 = sbr.rel (%p2012) target = $region68
      $region67: #{tpu_custom_call.1} parent=5 // pred_region
        %s2015 = ssub.s32 %s21, 2
        // Predicated region
        $region69: #{tpu_custom_call.1} parent=67 // pred_check
          %p2016 = pneg %p214
        $region70: #{tpu_custom_call.1} parent=67 // pred_check_branch
          %2018 = sbr.rel (%p2016) target = $region72
        $region71: #{tpu_custom_call.1} parent=67 // pred_region
          %s2019 = sand.u32 %s199, 1
          %s2020 = scalar_lea.sflag [#allocation12], %s2019
          %s2021 = sand.u32 %s199, 1
          %s2022 = smul.addr %s2021, 16
          %s2023 = scalar_lea.vmem [#allocation13], %s2022
          %2024 = dma.done %s2020, 256
        $region72: #{tpu_custom_call.1} parent=67 // pred_fallthru
          _
      $region68: #{tpu_custom_call.1} parent=5 // pred_fallthru
        _
    $region6: #{tpu_custom_call.1} parent=1 // loop_footer
      %s25 = sadd.s32 1, %s21
    $region7: #{tpu_custom_call.1} parent=1 // loop_footer_branch
      %20 = sbr.rel target = $region3
    $region8: #{tpu_custom_call.1} parent=1 // loop_exit
      _
    %2025 = vsyncpa [#allocation11], 1
    %s2026 = scalar_lea.sflag [#allocation11], 1
    %2027 = vsyncpa %s2026, 1
    %2028 = vsyncpa [#allocation12], 1
    %s2029 = scalar_lea.sflag [#allocation12], 1
    %2030 = vsyncpa %s2029, 1

</llo_original>
